<compile_context>
chip_gen: v6e
topology: v6e:2x2x1
jax: 0.10.0
libtpu: 0.0.40
codegen_flags: <defaults>
</compile_context>

<pallas_src>
import functools

import jax
import jax.numpy as jnp
from jax.experimental import pallas as pl
from jax.experimental.pallas import tpu as pltpu

HIDDEN = 256
NEG_SLOPE = 0.01  # PyTorch default for F.leaky_relu


def _leaky_relu(x):
    # single mul + max per element (cheaper than compare+select on the VPU)
    return jnp.maximum(x, NEG_SLOPE * x)


def mlp2_kernel(x_ref,
                w1_ref, b1_ref,
                w2_ref, b2_ref,
                w3_ref, b3_ref,
                w4_ref, b4_ref,
                w5t_ref, b5_ref,
                o_ref):
    x = x_ref[...]                                   # (tn, 1)

    # layer1: contraction dim K=1 -> pure VPU broadcast, skip the MXU entirely.
    h = x * w1_ref[...] + b1_ref[...]                # (tn,1)*(1,256) -> (tn,256)
    h = _leaky_relu(h)

    # layers 2-4: 256x256 matmuls on the MXU (f32 accumulate).
    h = jnp.dot(h, w2_ref[...], preferred_element_type=jnp.float32) + b2_ref[...]
    h = _leaky_relu(h)
    h = jnp.dot(h, w3_ref[...], preferred_element_type=jnp.float32) + b3_ref[...]
    h = _leaky_relu(h)
    h = jnp.dot(h, w4_ref[...], preferred_element_type=jnp.float32) + b4_ref[...]
    h = _leaky_relu(h)

    # layer5: output dim = 1 -> XLU row-reduce instead of an MXU pass with one live
    # output column.  Output store is (tn, 1); total output volume is tiny, so the
    # narrow (masked) stores are negligible next to the matmul cycles.
    y = jnp.sum(h * w5t_ref[...], axis=-1, keepdims=True) + b5_ref[...]
    o_ref[...] = y.astype(o_ref.dtype)               # (tn, 1)


@functools.partial(jax.jit, static_argnames=("tile_n",))
def mlp2_forward(x, params, *, tile_n=1024):
    """x: (N, 1) float32.  params: weights [in,out], biases [1,out]."""
    N, F = x.shape
    assert F == 1

    # Pick a batch tile: one grid step for small N, else tile_n rows per step.
    # tile_n is kept a multiple of 256 so every MXU pass is fully utilized; the
    # single-step path only needs sublane (8) alignment.
    if N <= tile_n:
        tile = max(8, -(-N // 8) * 8)                # single step, sublane-aligned
    else:
        tile = tile_n
    n_pad = -(-N // tile) * tile
    xp = x if n_pad == N else jnp.pad(x, ((0, n_pad - N), (0, 0)))
    grid = (n_pad // tile,)

    w1, b1 = params["w1"], params["b1"]
    w2, b2 = params["w2"], params["b2"]
    w3, b3 = params["w3"], params["b3"]
    w4, b4 = params["w4"], params["b4"]
    w5t = params["w5"].T                             # (1, 256) for the row-reduce
    b5 = params["b5"]                                # (1, 1)

    # Constant index map -> block stays VMEM-resident, no re-DMA per grid step.
    resident = lambda a: pl.BlockSpec(a.shape, lambda i: (0, 0))

    # Advisory cost estimate so XLA schedules/overlaps this call sensibly.
    flops = 2 * n_pad * (HIDDEN + 3 * HIDDEN * HIDDEN + HIDDEN)
    param_bytes = 4 * (HIDDEN + HIDDEN                     # w1, b1
                       + 3 * (HIDDEN * HIDDEN + HIDDEN)    # w2..w4, b2..b4
                       + HIDDEN + 1)                       # w5, b5
    bytes_accessed = 4 * (n_pad + n_pad) + param_bytes

    out = pl.pallas_call(
        mlp2_kernel,
        out_shape=jax.ShapeDtypeStruct((n_pad, 1), x.dtype),
        grid_spec=pl.GridSpec(
            grid=grid,
            in_specs=[
                pl.BlockSpec((tile, 1), lambda i: (i, 0)),   # x tile
                resident(w1), resident(b1),
                resident(w2), resident(b2),
                resident(w3), resident(b3),
                resident(w4), resident(b4),
                resident(w5t), resident(b5),
            ],
            out_specs=pl.BlockSpec((tile, 1), lambda i: (i, 0)),
        ),
        compiler_params=pltpu.CompilerParams(
            dimension_semantics=("parallel",)),
        cost_estimate=pl.CostEstimate(
            flops=flops, transcendentals=0, bytes_accessed=bytes_accessed),
    )(xp, w1, b1, w2, b2, w3, b3, w4, b4, w5t, b5)

    return out[:N]


def init_params(key):
    """Deterministic init mimicking torch.nn.Linear default U(-1/sqrt(fan_in), ...)."""
    dims = [(1, HIDDEN), (HIDDEN, HIDDEN), (HIDDEN, HIDDEN), (HIDDEN, HIDDEN), (HIDDEN, 1)]
    params = {}
    for idx, (fan_in, fan_out) in enumerate(dims, start=1):
        key, kw, kb = jax.random.split(key, 3)
        bound = 1.0 / jnp.sqrt(float(fan_in))
        params[f"w{idx}"] = jax.random.uniform(
            kw, (fan_in, fan_out), jnp.float32, minval=-bound, maxval=bound)
        params[f"b{idx}"] = jax.random.uniform(
            kb, (1, fan_out), jnp.float32, minval=-bound, maxval=bound)
    return params


def mlp2_ref(x, params):
    h = x
    for i in range(1, 5):
        h = jnp.dot(h, params[f"w{i}"], precision=jax.lax.Precision.HIGHEST) + params[f"b{i}"]
        h = jnp.maximum(h, NEG_SLOPE * h)
    return jnp.dot(h, params["w5"], precision=jax.lax.Precision.HIGHEST) + params["b5"]


if __name__ == "__main__":
    key = jax.random.PRNGKey(0)
    kp, kx = jax.random.split(key)
    params = init_params(kp)

    N = 300  # batch of scalar samples (N, 1); exercises the padded single-tile path
    x = jax.random.normal(kx, (N, 1), jnp.float32)

    out = mlp2_forward(x, params, tile_n=1024)
    out = jax.block_until_ready(out)

    ref = mlp2_ref(x, params)
    assert out.shape == (N, 1)
    assert jnp.allclose(out, ref, atol=1e-4, rtol=1e-3), "mismatch vs reference"
    print("KERNEL_OK")
</pallas_src>

<mosaic_0001>
module attributes {stable_mosaic.version = 11 : i64} {
  func.func @mlp2_kernel(%arg0: i32, %arg1: memref<304x1xf32, #tpu.memory_space<vmem>>, %arg2: memref<1x256xf32, #tpu.memory_space<vmem>>, %arg3: memref<1x256xf32, #tpu.memory_space<vmem>>, %arg4: memref<256x256xf32, #tpu.memory_space<vmem>>, %arg5: memref<1x256xf32, #tpu.memory_space<vmem>>, %arg6: memref<256x256xf32, #tpu.memory_space<vmem>>, %arg7: memref<1x256xf32, #tpu.memory_space<vmem>>, %arg8: memref<256x256xf32, #tpu.memory_space<vmem>>, %arg9: memref<1x256xf32, #tpu.memory_space<vmem>>, %arg10: memref<1x256xf32, #tpu.memory_space<vmem>>, %arg11: memref<1x1xf32, #tpu.memory_space<vmem>>, %arg12: memref<304x1xf32, #tpu.memory_space<vmem>>) attributes {dimension_semantics = [#tpu.dimension_semantics<parallel>], iteration_bounds = array<i64: 1>, scalar_prefetch = 0 : i64, scratch_operands = 0 : i64, tpu.core_type = #tpu.core_type<tc>, window_params = [{transform_indices = @transform_0, window_bounds = array<i64: 304, 1>}, {pipeline_mode = #tpu.pipeline_mode<synchronous>, transform_indices = @transform_1, window_bounds = array<i64: 1, 256>}, {pipeline_mode = #tpu.pipeline_mode<synchronous>, transform_indices = @transform_2, window_bounds = array<i64: 1, 256>}, {pipeline_mode = #tpu.pipeline_mode<synchronous>, transform_indices = @transform_3, window_bounds = array<i64: 256, 256>}, {pipeline_mode = #tpu.pipeline_mode<synchronous>, transform_indices = @transform_4, window_bounds = array<i64: 1, 256>}, {pipeline_mode = #tpu.pipeline_mode<synchronous>, transform_indices = @transform_5, window_bounds = array<i64: 256, 256>}, {pipeline_mode = #tpu.pipeline_mode<synchronous>, transform_indices = @transform_6, window_bounds = array<i64: 1, 256>}, {pipeline_mode = #tpu.pipeline_mode<synchronous>, transform_indices = @transform_7, window_bounds = array<i64: 256, 256>}, {pipeline_mode = #tpu.pipeline_mode<synchronous>, transform_indices = @transform_8, window_bounds = array<i64: 1, 256>}, {pipeline_mode = #tpu.pipeline_mode<synchronous>, transform_indices = @transform_9, window_bounds = array<i64: 1, 256>}, {pipeline_mode = #tpu.pipeline_mode<synchronous>, transform_indices = @transform_10, window_bounds = array<i64: 1, 1>}, {transform_indices = @transform_11, window_bounds = array<i64: 304, 1>}]} {
    %c0 = arith.constant 0 : index
    %c0_0 = arith.constant 0 : index
    %0 = vector.load %arg1[%c0, %c0_0] : memref<304x1xf32, #tpu.memory_space<vmem>>, vector<304x1xf32>
    %c0_1 = arith.constant 0 : index
    %c0_2 = arith.constant 0 : index
    %1 = vector.load %arg2[%c0_1, %c0_2] : memref<1x256xf32, #tpu.memory_space<vmem>>, vector<1x256xf32>
    %2 = vector.broadcast %0 : vector<304x1xf32> to vector<304x256xf32>
    %3 = vector.broadcast %1 : vector<1x256xf32> to vector<304x256xf32>
    %4 = arith.mulf %2, %3 : vector<304x256xf32>
    %c0_3 = arith.constant 0 : index
    %c0_4 = arith.constant 0 : index
    %5 = vector.load %arg3[%c0_3, %c0_4] : memref<1x256xf32, #tpu.memory_space<vmem>>, vector<1x256xf32>
    %6 = vector.broadcast %5 : vector<1x256xf32> to vector<304x256xf32>
    %7 = arith.addf %4, %6 : vector<304x256xf32>
    %cst = arith.constant 0.00999999977 : f32
    %8 = vector.broadcast %cst : f32 to vector<304x256xf32>
    %9 = arith.mulf %8, %7 : vector<304x256xf32>
    %10 = arith.maximumf %7, %9 : vector<304x256xf32>
    %c0_5 = arith.constant 0 : index
    %c0_6 = arith.constant 0 : index
    %11 = vector.load %arg4[%c0_5, %c0_6] : memref<256x256xf32, #tpu.memory_space<vmem>>, vector<256x256xf32>
    %cst_7 = arith.constant dense<0.000000e+00> : vector<304x256xf32>
    %12 = tpu.matmul %10, %11, %cst_7 {dimension_numbers = #tpu.dot_dimension_numbers<[1], [0], [0], [1], [0, 0, 1, 1], [], []>} : vector<304x256xf32>, vector<256x256xf32>, vector<304x256xf32> -> vector<304x256xf32>
    %c0_8 = arith.constant 0 : index
    %c0_9 = arith.constant 0 : index
    %13 = vector.load %arg5[%c0_8, %c0_9] : memref<1x256xf32, #tpu.memory_space<vmem>>, vector<1x256xf32>
    %14 = vector.broadcast %13 : vector<1x256xf32> to vector<304x256xf32>
    %15 = arith.addf %12, %14 : vector<304x256xf32>
    %cst_10 = arith.constant 0.00999999977 : f32
    %16 = vector.broadcast %cst_10 : f32 to vector<304x256xf32>
    %17 = arith.mulf %16, %15 : vector<304x256xf32>
    %18 = arith.maximumf %15, %17 : vector<304x256xf32>
    %c0_11 = arith.constant 0 : index
    %c0_12 = arith.constant 0 : index
    %19 = vector.load %arg6[%c0_11, %c0_12] : memref<256x256xf32, #tpu.memory_space<vmem>>, vector<256x256xf32>
    %cst_13 = arith.constant dense<0.000000e+00> : vector<304x256xf32>
    %20 = tpu.matmul %18, %19, %cst_13 {dimension_numbers = #tpu.dot_dimension_numbers<[1], [0], [0], [1], [0, 0, 1, 1], [], []>} : vector<304x256xf32>, vector<256x256xf32>, vector<304x256xf32> -> vector<304x256xf32>
    %c0_14 = arith.constant 0 : index
    %c0_15 = arith.constant 0 : index
    %21 = vector.load %arg7[%c0_14, %c0_15] : memref<1x256xf32, #tpu.memory_space<vmem>>, vector<1x256xf32>
    %22 = vector.broadcast %21 : vector<1x256xf32> to vector<304x256xf32>
    %23 = arith.addf %20, %22 : vector<304x256xf32>
    %cst_16 = arith.constant 0.00999999977 : f32
    %24 = vector.broadcast %cst_16 : f32 to vector<304x256xf32>
    %25 = arith.mulf %24, %23 : vector<304x256xf32>
    %26 = arith.maximumf %23, %25 : vector<304x256xf32>
    %c0_17 = arith.constant 0 : index
    %c0_18 = arith.constant 0 : index
    %27 = vector.load %arg8[%c0_17, %c0_18] : memref<256x256xf32, #tpu.memory_space<vmem>>, vector<256x256xf32>
    %cst_19 = arith.constant dense<0.000000e+00> : vector<304x256xf32>
    %28 = tpu.matmul %26, %27, %cst_19 {dimension_numbers = #tpu.dot_dimension_numbers<[1], [0], [0], [1], [0, 0, 1, 1], [], []>} : vector<304x256xf32>, vector<256x256xf32>, vector<304x256xf32> -> vector<304x256xf32>
    %c0_20 = arith.constant 0 : index
    %c0_21 = arith.constant 0 : index
    %29 = vector.load %arg9[%c0_20, %c0_21] : memref<1x256xf32, #tpu.memory_space<vmem>>, vector<1x256xf32>
    %30 = vector.broadcast %29 : vector<1x256xf32> to vector<304x256xf32>
    %31 = arith.addf %28, %30 : vector<304x256xf32>
    %cst_22 = arith.constant 0.00999999977 : f32
    %32 = vector.broadcast %cst_22 : f32 to vector<304x256xf32>
    %33 = arith.mulf %32, %31 : vector<304x256xf32>
    %34 = arith.maximumf %31, %33 : vector<304x256xf32>
    %c0_23 = arith.constant 0 : index
    %c0_24 = arith.constant 0 : index
    %35 = vector.load %arg10[%c0_23, %c0_24] : memref<1x256xf32, #tpu.memory_space<vmem>>, vector<1x256xf32>
    %36 = vector.broadcast %35 : vector<1x256xf32> to vector<304x256xf32>
    %37 = arith.mulf %34, %36 : vector<304x256xf32>
    %cst_25 = arith.constant dense<0.000000e+00> : vector<304xf32>
    %38 = vector.multi_reduction <add>, %37, %cst_25 [1] : vector<304x256xf32> to vector<304xf32>
    %39 = vector.shape_cast %38 : vector<304xf32> to vector<304x1xf32>
    %c0_26 = arith.constant 0 : index
    %c0_27 = arith.constant 0 : index
    %40 = vector.load %arg11[%c0_26, %c0_27] : memref<1x1xf32, #tpu.memory_space<vmem>>, vector<1x1xf32>
    %41 = vector.broadcast %40 : vector<1x1xf32> to vector<304x1xf32>
    %42 = arith.addf %39, %41 : vector<304x1xf32>
    %c0_28 = arith.constant 0 : index
    %c0_29 = arith.constant 0 : index
    %43 = vector.load %arg12[%c0_28, %c0_29] : memref<304x1xf32, #tpu.memory_space<vmem>>, vector<304x1xf32>
    tpu.vector_store %arg12[%c0_28, %c0_29], %42 {strides = array<i32>} : memref<304x1xf32, #tpu.memory_space<vmem>>, vector<304x1xf32>,
    return
  }
  func.func @transform_0(%arg0: i32) -> (i32, i32) {
    %c0_i32 = arith.constant 0 : i32
    %c0_i32_0 = arith.constant 0 : i32
    return %arg0, %c0_i32 : i32, i32
  }
  func.func @transform_1(%arg0: i32) -> (i32, i32) {
    %c0_i32 = arith.constant 0 : i32
    %c0_i32_0 = arith.constant 0 : i32
    %c0_i32_1 = arith.constant 0 : i32
    return %c0_i32, %c0_i32_0 : i32, i32
  }
  func.func @transform_2(%arg0: i32) -> (i32, i32) {
    %c0_i32 = arith.constant 0 : i32
    %c0_i32_0 = arith.constant 0 : i32
    %c0_i32_1 = arith.constant 0 : i32
    return %c0_i32, %c0_i32_0 : i32, i32
  }
  func.func @transform_3(%arg0: i32) -> (i32, i32) {
    %c0_i32 = arith.constant 0 : i32
    %c0_i32_0 = arith.constant 0 : i32
    %c0_i32_1 = arith.constant 0 : i32
    return %c0_i32, %c0_i32_0 : i32, i32
  }
  func.func @transform_4(%arg0: i32) -> (i32, i32) {
    %c0_i32 = arith.constant 0 : i32
    %c0_i32_0 = arith.constant 0 : i32
    %c0_i32_1 = arith.constant 0 : i32
    return %c0_i32, %c0_i32_0 : i32, i32
  }
  func.func @transform_5(%arg0: i32) -> (i32, i32) {
    %c0_i32 = arith.constant 0 : i32
    %c0_i32_0 = arith.constant 0 : i32
    %c0_i32_1 = arith.constant 0 : i32
    return %c0_i32, %c0_i32_0 : i32, i32
  }
  func.func @transform_6(%arg0: i32) -> (i32, i32) {
    %c0_i32 = arith.constant 0 : i32
    %c0_i32_0 = arith.constant 0 : i32
    %c0_i32_1 = arith.constant 0 : i32
    return %c0_i32, %c0_i32_0 : i32, i32
  }
  func.func @transform_7(%arg0: i32) -> (i32, i32) {
    %c0_i32 = arith.constant 0 : i32
    %c0_i32_0 = arith.constant 0 : i32
    %c0_i32_1 = arith.constant 0 : i32
    return %c0_i32, %c0_i32_0 : i32, i32
  }
  func.func @transform_8(%arg0: i32) -> (i32, i32) {
    %c0_i32 = arith.constant 0 : i32
    %c0_i32_0 = arith.constant 0 : i32
    %c0_i32_1 = arith.constant 0 : i32
    return %c0_i32, %c0_i32_0 : i32, i32
  }
  func.func @transform_9(%arg0: i32) -> (i32, i32) {
    %c0_i32 = arith.constant 0 : i32
    %c0_i32_0 = arith.constant 0 : i32
    %c0_i32_1 = arith.constant 0 : i32
    return %c0_i32, %c0_i32_0 : i32, i32
  }
  func.func @transform_10(%arg0: i32) -> (i32, i32) {
    %c0_i32 = arith.constant 0 : i32
    %c0_i32_0 = arith.constant 0 : i32
    %c0_i32_1 = arith.constant 0 : i32
    return %c0_i32, %c0_i32_0 : i32, i32
  }
  func.func @transform_11(%arg0: i32) -> (i32, i32) {
    %c0_i32 = arith.constant 0 : i32
    %c0_i32_0 = arith.constant 0 : i32
    return %arg0, %c0_i32 : i32, i32
  }
}

</mosaic_0001>

<llo_original>
// kernel: mlp2_forward.1
$region0: #{mlp2_forward.1}
  #allocation0 [shape = 'u32[]', space=smem, size = 0x4, offset = 0x4, fixed_abs, tag = 'smem constant byte address 0x4 - core index']
  #allocation1 [shape = 'u32[144,128]{1,0:T(1,128)}', space=vmem, size = 0x12000, scoped, tag = 'internal scratch']
  #allocation2 [shape = 'f32[1,1]{1,0:T(1,128)S(1)}', space=vmem, size = 0x200, scoped, tag = 'scoped memory for mlp2_forward.1']
  %s0 = inlined_call_operand.vmem [shape: f32[304,1], index: 0, kind: input, shape index: {}]
  %s1 = inlined_call_operand.vmem [shape: f32[1,256], index: 1, kind: input, shape index: {}]
  %s2 = inlined_call_operand.vmem [shape: f32[1,256], index: 2, kind: input, shape index: {}]
  %s3 = inlined_call_operand.vmem [shape: f32[256,256], index: 3, kind: input, shape index: {}]
  %s4 = inlined_call_operand.vmem [shape: f32[1,256], index: 4, kind: input, shape index: {}]
  %s5 = inlined_call_operand.hbm [shape: f32[256,256], index: 5, kind: input, shape index: {}]
  %s6 = inlined_call_operand.vmem [shape: f32[1,256], index: 6, kind: input, shape index: {}]
  %s7 = inlined_call_operand.hbm [shape: f32[256,256], index: 7, kind: input, shape index: {}]
  %s8 = inlined_call_operand.vmem [shape: f32[1,256], index: 8, kind: input, shape index: {}]
  %s9 = inlined_call_operand.vmem [shape: f32[1,256], index: 9, kind: input, shape index: {}]
  %s10 = inlined_call_operand.<no memory space> [shape: f32[1,1], index: 10, kind: input, shape index: {}]
  %s11 = inlined_call_operand.vmem [shape: f32[304,1], index: 11, kind: output, shape index: {}]
  %s12 = sld [smem:[#allocation0]]
  $region62: #{mlp2_forward.1} parent=0
    _
  %s14 = ssub.s32 1, %s12
  %s15 = scalar_select 0, %s14, %s12
  %v16 = vstv %s10
  %17 = vst [vmem:[#allocation2] sm:$0x1] %v16
  $region1: #{mlp2_forward.1} parent=0
    #allocation3 [shape = 'u8[262144]{0}', space=vmem, size = 0x40000, scoped, tag = 'input window, operand 5, single buffered']
    #allocation4 [shape = 's32[1]{0}', space=sflag, size = 0x4, scoped, tag = 'scoped memory for mlp2_forward.1']
    #allocation5 [shape = 'u8[262144]{0}', space=vmem, size = 0x40000, scoped, tag = 'input window, operand 7, single buffered']
    #allocation6 [shape = 's32[1]{0}', space=sflag, size = 0x4, scoped, tag = 'scoped memory for mlp2_forward.1']
    %18 = vsyncpa [#allocation4], 0
    %19 = vsyncpa [#allocation6], 0
    // Predicated region
    $region2: #{mlp2_forward.1} parent=1 // pred_check
      _
    $region3: #{mlp2_forward.1} parent=1 // pred_check_branch
      %21 = sbr.rel (0) target = $region5
    $region4: #{mlp2_forward.1} parent=1 // pred_region
      _
    $region5: #{mlp2_forward.1} parent=1 // pred_fallthru
      _
    // Predicated region
    $region6: #{mlp2_forward.1} parent=1 // pred_check
      _
    $region7: #{mlp2_forward.1} parent=1 // pred_check_branch
      %23 = sbr.rel (0) target = $region9
    $region8: #{mlp2_forward.1} parent=1 // pred_region
      _
    $region9: #{mlp2_forward.1} parent=1 // pred_fallthru
      _
    // Predicated region
    $region10: #{mlp2_forward.1} parent=1 // pred_check
      _
    $region11: #{mlp2_forward.1} parent=1 // pred_check_branch
      %25 = sbr.rel (0) target = $region13
    $region12: #{mlp2_forward.1} parent=1 // pred_region
      _
    $region13: #{mlp2_forward.1} parent=1 // pred_fallthru
      _
    // Predicated region
    $region14: #{mlp2_forward.1} parent=1 // pred_check
      _
    $region15: #{mlp2_forward.1} parent=1 // pred_check_branch
      %27 = sbr.rel (0) target = $region17
    $region16: #{mlp2_forward.1} parent=1 // pred_region
      _
    $region17: #{mlp2_forward.1} parent=1 // pred_fallthru
      _
    // Predicated region
    $region18: #{mlp2_forward.1} parent=1 // pred_check
      _
    $region19: #{mlp2_forward.1} parent=1 // pred_check_branch
      %29 = sbr.rel (0) target = $region21
    $region20: #{mlp2_forward.1} parent=1 // pred_region
      _
    $region21: #{mlp2_forward.1} parent=1 // pred_fallthru
      _
    // Predicated region
    $region22: #{mlp2_forward.1} parent=1 // pred_check
      _
    $region23: #{mlp2_forward.1} parent=1 // pred_check_branch
      %31 = sbr.rel (0) target = $region25
    $region24: #{mlp2_forward.1} parent=1 // pred_region
      %s33 = ssub.s32 8192, 8192
      %34 = vsyncadd [#allocation4], %s33
      %s35 = sshll.u32 [#allocation3], 4
      %s36 = int_to_ptr.vmem [resolvable:$true] %s35
      %41 = dma.hbm_to_vmem [thread:$0]  %s5, 8192, %s36, [#allocation4], 256, 256, 16
    $region25: #{mlp2_forward.1} parent=1 // pred_fallthru
      _
    // Predicated region
    $region26: #{mlp2_forward.1} parent=1 // pred_check
      _
    $region27: #{mlp2_forward.1} parent=1 // pred_check_branch
      %43 = sbr.rel (0) target = $region29
    $region28: #{mlp2_forward.1} parent=1 // pred_region
      _
    $region29: #{mlp2_forward.1} parent=1 // pred_fallthru
      _
    // Predicated region
    $region30: #{mlp2_forward.1} parent=1 // pred_check
      _
    $region31: #{mlp2_forward.1} parent=1 // pred_check_branch
      %45 = sbr.rel (0) target = $region33
    $region32: #{mlp2_forward.1} parent=1 // pred_region
      %s47 = ssub.s32 8192, 8192
      %48 = vsyncadd [#allocation6], %s47
      %s49 = sshll.u32 [#allocation5], 4
      %s50 = int_to_ptr.vmem [resolvable:$true] %s49
      %55 = dma.hbm_to_vmem [thread:$0]  %s7, 8192, %s50, [#allocation6], 256, 256, 16
    $region33: #{mlp2_forward.1} parent=1 // pred_fallthru
      _
    // Predicated region
    $region34: #{mlp2_forward.1} parent=1 // pred_check
      _
    $region35: #{mlp2_forward.1} parent=1 // pred_check_branch
      %57 = sbr.rel (0) target = $region37
    $region36: #{mlp2_forward.1} parent=1 // pred_region
      _
    $region37: #{mlp2_forward.1} parent=1 // pred_fallthru
      _
    // Predicated region
    $region38: #{mlp2_forward.1} parent=1 // pred_check
      _
    $region39: #{mlp2_forward.1} parent=1 // pred_check_branch
      %59 = sbr.rel (0) target = $region41
    $region40: #{mlp2_forward.1} parent=1 // pred_region
      _
    $region41: #{mlp2_forward.1} parent=1 // pred_fallthru
      _
    // Predicated region
    $region42: #{mlp2_forward.1} parent=1 // pred_check
      _
    $region43: #{mlp2_forward.1} parent=1 // pred_check_branch
      %61 = sbr.rel (0) target = $region45
    $region44: #{mlp2_forward.1} parent=1 // pred_region
      _
    $region45: #{mlp2_forward.1} parent=1 // pred_fallthru
      _
    // Predicated region
    $region46: #{mlp2_forward.1} parent=1 // pred_check
      _
    $region47: #{mlp2_forward.1} parent=1 // pred_check_branch
      %63 = sbr.rel (0) target = $region49
    $region48: #{mlp2_forward.1} parent=1 // pred_region
      %64 = dma.done [#allocation4], 8192
    $region49: #{mlp2_forward.1} parent=1 // pred_fallthru
      _
    // Predicated region
    $region50: #{mlp2_forward.1} parent=1 // pred_check
      _
    $region51: #{mlp2_forward.1} parent=1 // pred_check_branch
      %66 = sbr.rel (0) target = $region53
    $region52: #{mlp2_forward.1} parent=1 // pred_region
      %67 = dma.done [#allocation6], 8192
    $region53: #{mlp2_forward.1} parent=1 // pred_fallthru
      _
    %v68 = vld [vmem:[%s0] sm:$0xff]
    %v69 = vld [vmem:[%s0 + $0x8] sm:$0xff]
    %v70 = vld [vmem:[%s0 + $0x10] sm:$0xff]
    %v71 = vld [vmem:[%s0 + $0x18] sm:$0xff]
    %v72 = vld [vmem:[%s0 + $0x20] sm:$0xff]
    %v73 = vld [vmem:[%s0 + $0x28] sm:$0xff]
    %v74 = vld [vmem:[%s0 + $0x30] sm:$0xff]
    %v75 = vld [vmem:[%s0 + $0x38] sm:$0xff]
    %v76 = vld [vmem:[%s0 + $0x40] sm:$0xff]
    %v77 = vld [vmem:[%s0 + $0x48] sm:$0xff]
    %v78 = vld [vmem:[%s0 + $0x50] sm:$0xff]
    %v79 = vld [vmem:[%s0 + $0x58] sm:$0xff]
    %v80 = vld [vmem:[%s0 + $0x60] sm:$0xff]
    %v81 = vld [vmem:[%s0 + $0x68] sm:$0xff]
    %v82 = vld [vmem:[%s0 + $0x70] sm:$0xff]
    %v83 = vld [vmem:[%s0 + $0x78] sm:$0xff]
    %v84 = vld [vmem:[%s0 + $0x80] sm:$0xff]
    %v85 = vld [vmem:[%s0 + $0x88] sm:$0xff]
    %v86 = vld [vmem:[%s0 + $0x90] sm:$0xff]
    %v87 = vld [vmem:[%s0 + $0x98] sm:$0xff]
    %v88 = vld [vmem:[%s0 + $0xa0] sm:$0xff]
    %v89 = vld [vmem:[%s0 + $0xa8] sm:$0xff]
    %v90 = vld [vmem:[%s0 + $0xb0] sm:$0xff]
    %v91 = vld [vmem:[%s0 + $0xb8] sm:$0xff]
    %v92 = vld [vmem:[%s0 + $0xc0] sm:$0xff]
    %v93 = vld [vmem:[%s0 + $0xc8] sm:$0xff]
    %v94 = vld [vmem:[%s0 + $0xd0] sm:$0xff]
    %v95 = vld [vmem:[%s0 + $0xd8] sm:$0xff]
    %v96 = vld [vmem:[%s0 + $0xe0] sm:$0xff]
    %v97 = vld [vmem:[%s0 + $0xe8] sm:$0xff]
    %v98 = vld [vmem:[%s0 + $0xf0] sm:$0xff]
    %v99 = vld [vmem:[%s0 + $0xf8] sm:$0xff]
    %v100 = vld [vmem:[%s0 + $0x100] sm:$0xff]
    %v101 = vld [vmem:[%s0 + $0x108] sm:$0xff]
    %v102 = vld [vmem:[%s0 + $0x110] sm:$0xff]
    %v103 = vld [vmem:[%s0 + $0x118] sm:$0xff]
    %v104 = vld [vmem:[%s0 + $0x120] sm:$0xff]
    %v105 = vld [vmem:[%s0 + $0x128] sm:$0xff]
    %v106 = vld [vmem:[%s1] sm:$0x3]
    %108 = vset.pattern.permute.xlu0 0
    %109 = vperm.xlu0 %108, %v68
    %v110 = vpop.permute.xlu0 %109
    %113 = vset.pattern.permute.xlu0 0
    %114 = vperm.xlu0 %113, %v69
    %v115 = vpop.permute.xlu0 %114
    %118 = vset.pattern.permute.xlu0 0
    %119 = vperm.xlu0 %118, %v70
    %v120 = vpop.permute.xlu0 %119
    %123 = vset.pattern.permute.xlu0 0
    %124 = vperm.xlu0 %123, %v71
    %v125 = vpop.permute.xlu0 %124
    %128 = vset.pattern.permute.xlu0 0
    %129 = vperm.xlu0 %128, %v72
    %v130 = vpop.permute.xlu0 %129
    %133 = vset.pattern.permute.xlu0 0
    %134 = vperm.xlu0 %133, %v73
    %v135 = vpop.permute.xlu0 %134
    %138 = vset.pattern.permute.xlu0 0
    %139 = vperm.xlu0 %138, %v74
    %v140 = vpop.permute.xlu0 %139
    %143 = vset.pattern.permute.xlu0 0
    %144 = vperm.xlu0 %143, %v75
    %v145 = vpop.permute.xlu0 %144
    %148 = vset.pattern.permute.xlu0 0
    %149 = vperm.xlu0 %148, %v76
    %v150 = vpop.permute.xlu0 %149
    %153 = vset.pattern.permute.xlu0 0
    %154 = vperm.xlu0 %153, %v77
    %v155 = vpop.permute.xlu0 %154
    %158 = vset.pattern.permute.xlu0 0
    %159 = vperm.xlu0 %158, %v78
    %v160 = vpop.permute.xlu0 %159
    %163 = vset.pattern.permute.xlu0 0
    %164 = vperm.xlu0 %163, %v79
    %v165 = vpop.permute.xlu0 %164
    %168 = vset.pattern.permute.xlu0 0
    %169 = vperm.xlu0 %168, %v80
    %v170 = vpop.permute.xlu0 %169
    %173 = vset.pattern.permute.xlu0 0
    %174 = vperm.xlu0 %173, %v81
    %v175 = vpop.permute.xlu0 %174
    %178 = vset.pattern.permute.xlu0 0
    %179 = vperm.xlu0 %178, %v82
    %v180 = vpop.permute.xlu0 %179
    %183 = vset.pattern.permute.xlu0 0
    %184 = vperm.xlu0 %183, %v83
    %v185 = vpop.permute.xlu0 %184
    %188 = vset.pattern.permute.xlu0 0
    %189 = vperm.xlu0 %188, %v84
    %v190 = vpop.permute.xlu0 %189
    %193 = vset.pattern.permute.xlu0 0
    %194 = vperm.xlu0 %193, %v85
    %v195 = vpop.permute.xlu0 %194
    %198 = vset.pattern.permute.xlu0 0
    %199 = vperm.xlu0 %198, %v86
    %v200 = vpop.permute.xlu0 %199
    %203 = vset.pattern.permute.xlu0 0
    %204 = vperm.xlu0 %203, %v87
    %v205 = vpop.permute.xlu0 %204
    %208 = vset.pattern.permute.xlu0 0
    %209 = vperm.xlu0 %208, %v88
    %v210 = vpop.permute.xlu0 %209
    %213 = vset.pattern.permute.xlu0 0
    %214 = vperm.xlu0 %213, %v89
    %v215 = vpop.permute.xlu0 %214
    %218 = vset.pattern.permute.xlu0 0
    %219 = vperm.xlu0 %218, %v90
    %v220 = vpop.permute.xlu0 %219
    %223 = vset.pattern.permute.xlu0 0
    %224 = vperm.xlu0 %223, %v91
    %v225 = vpop.permute.xlu0 %224
    %228 = vset.pattern.permute.xlu0 0
    %229 = vperm.xlu0 %228, %v92
    %v230 = vpop.permute.xlu0 %229
    %233 = vset.pattern.permute.xlu0 0
    %234 = vperm.xlu0 %233, %v93
    %v235 = vpop.permute.xlu0 %234
    %238 = vset.pattern.permute.xlu0 0
    %239 = vperm.xlu0 %238, %v94
    %v240 = vpop.permute.xlu0 %239
    %243 = vset.pattern.permute.xlu0 0
    %244 = vperm.xlu0 %243, %v95
    %v245 = vpop.permute.xlu0 %244
    %248 = vset.pattern.permute.xlu0 0
    %249 = vperm.xlu0 %248, %v96
    %v250 = vpop.permute.xlu0 %249
    %253 = vset.pattern.permute.xlu0 0
    %254 = vperm.xlu0 %253, %v97
    %v255 = vpop.permute.xlu0 %254
    %258 = vset.pattern.permute.xlu0 0
    %259 = vperm.xlu0 %258, %v98
    %v260 = vpop.permute.xlu0 %259
    %263 = vset.pattern.permute.xlu0 0
    %264 = vperm.xlu0 %263, %v99
    %v265 = vpop.permute.xlu0 %264
    %268 = vset.pattern.permute.xlu0 0
    %269 = vperm.xlu0 %268, %v100
    %v270 = vpop.permute.xlu0 %269
    %273 = vset.pattern.permute.xlu0 0
    %274 = vperm.xlu0 %273, %v101
    %v275 = vpop.permute.xlu0 %274
    %278 = vset.pattern.permute.xlu0 0
    %279 = vperm.xlu0 %278, %v102
    %v280 = vpop.permute.xlu0 %279
    %283 = vset.pattern.permute.xlu0 0
    %284 = vperm.xlu0 %283, %v103
    %v285 = vpop.permute.xlu0 %284
    %288 = vset.pattern.permute.xlu0 0
    %289 = vperm.xlu0 %288, %v104
    %v290 = vpop.permute.xlu0 %289
    %293 = vset.pattern.permute.xlu0 0
    %294 = vperm.xlu0 %293, %v105
    %v295 = vpop.permute.xlu0 %294
    %v298 = vlaneseq
    %v299 = vshrl.u32 %v298, 7
    %v300 = vsub.s32 0, %v299
    %v301 = vrot.slane %v106, %v300
    %v302 = vlaneseq
    %v303 = vshrl.u32 %v302, 7
    %v304 = vsub.s32 1, %v303
    %v305 = vrot.slane %v106, %v304
    %v308 = vmul.f32 %v110, %v301
    %v309 = vmul.f32 %v110, %v305
    %v310 = vmul.f32 %v115, %v301
    %v311 = vmul.f32 %v115, %v305
    %v312 = vmul.f32 %v120, %v301
    %v313 = vmul.f32 %v120, %v305
    %v314 = vmul.f32 %v125, %v301
    %v315 = vmul.f32 %v125, %v305
    %v316 = vmul.f32 %v130, %v301
    %v317 = vmul.f32 %v130, %v305
    %v318 = vmul.f32 %v135, %v301
    %v319 = vmul.f32 %v135, %v305
    %v320 = vmul.f32 %v140, %v301
    %v321 = vmul.f32 %v140, %v305
    %v322 = vmul.f32 %v145, %v301
    %v323 = vmul.f32 %v145, %v305
    %v324 = vmul.f32 %v150, %v301
    %v325 = vmul.f32 %v150, %v305
    %v326 = vmul.f32 %v155, %v301
    %v327 = vmul.f32 %v155, %v305
    %v328 = vmul.f32 %v160, %v301
    %v329 = vmul.f32 %v160, %v305
    %v330 = vmul.f32 %v165, %v301
    %v331 = vmul.f32 %v165, %v305
    %v332 = vmul.f32 %v170, %v301
    %v333 = vmul.f32 %v170, %v305
    %v334 = vmul.f32 %v175, %v301
    %v335 = vmul.f32 %v175, %v305
    %v336 = vmul.f32 %v180, %v301
    %v337 = vmul.f32 %v180, %v305
    %v338 = vmul.f32 %v185, %v301
    %v339 = vmul.f32 %v185, %v305
    %v340 = vmul.f32 %v190, %v301
    %v341 = vmul.f32 %v190, %v305
    %v342 = vmul.f32 %v195, %v301
    %v343 = vmul.f32 %v195, %v305
    %v344 = vmul.f32 %v200, %v301
    %v345 = vmul.f32 %v200, %v305
    %v346 = vmul.f32 %v205, %v301
    %v347 = vmul.f32 %v205, %v305
    %v348 = vmul.f32 %v210, %v301
    %v349 = vmul.f32 %v210, %v305
    %v350 = vmul.f32 %v215, %v301
    %v351 = vmul.f32 %v215, %v305
    %v352 = vmul.f32 %v220, %v301
    %v353 = vmul.f32 %v220, %v305
    %v354 = vmul.f32 %v225, %v301
    %v355 = vmul.f32 %v225, %v305
    %v356 = vmul.f32 %v230, %v301
    %v357 = vmul.f32 %v230, %v305
    %v358 = vmul.f32 %v235, %v301
    %v359 = vmul.f32 %v235, %v305
    %v360 = vmul.f32 %v240, %v301
    %v361 = vmul.f32 %v240, %v305
    %v362 = vmul.f32 %v245, %v301
    %v363 = vmul.f32 %v245, %v305
    %v364 = vmul.f32 %v250, %v301
    %v365 = vmul.f32 %v250, %v305
    %v366 = vmul.f32 %v255, %v301
    %v367 = vmul.f32 %v255, %v305
    %v368 = vmul.f32 %v260, %v301
    %v369 = vmul.f32 %v260, %v305
    %v370 = vmul.f32 %v265, %v301
    %v371 = vmul.f32 %v265, %v305
    %v372 = vmul.f32 %v270, %v301
    %v373 = vmul.f32 %v270, %v305
    %v374 = vmul.f32 %v275, %v301
    %v375 = vmul.f32 %v275, %v305
    %v376 = vmul.f32 %v280, %v301
    %v377 = vmul.f32 %v280, %v305
    %v378 = vmul.f32 %v285, %v301
    %v379 = vmul.f32 %v285, %v305
    %v380 = vmul.f32 %v290, %v301
    %v381 = vmul.f32 %v290, %v305
    %v382 = vmul.f32 %v295, %v301
    %v383 = vmul.f32 %v295, %v305
    %v384 = vld [vmem:[%s2] sm:$0x3]
    %v386 = vlaneseq
    %v387 = vshrl.u32 %v386, 7
    %v388 = vsub.s32 0, %v387
    %v389 = vrot.slane %v384, %v388
    %v390 = vlaneseq
    %v391 = vshrl.u32 %v390, 7
    %v392 = vsub.s32 1, %v391
    %v393 = vrot.slane %v384, %v392
    %v396 = vadd.f32 %v308, %v389
    %v397 = vadd.f32 %v309, %v393
    %v398 = vadd.f32 %v310, %v389
    %v399 = vadd.f32 %v311, %v393
    %v400 = vadd.f32 %v312, %v389
    %v401 = vadd.f32 %v313, %v393
    %v402 = vadd.f32 %v314, %v389
    %v403 = vadd.f32 %v315, %v393
    %v404 = vadd.f32 %v316, %v389
    %v405 = vadd.f32 %v317, %v393
    %v406 = vadd.f32 %v318, %v389
    %v407 = vadd.f32 %v319, %v393
    %v408 = vadd.f32 %v320, %v389
    %v409 = vadd.f32 %v321, %v393
    %v410 = vadd.f32 %v322, %v389
    %v411 = vadd.f32 %v323, %v393
    %v412 = vadd.f32 %v324, %v389
    %v413 = vadd.f32 %v325, %v393
    %v414 = vadd.f32 %v326, %v389
    %v415 = vadd.f32 %v327, %v393
    %v416 = vadd.f32 %v328, %v389
    %v417 = vadd.f32 %v329, %v393
    %v418 = vadd.f32 %v330, %v389
    %v419 = vadd.f32 %v331, %v393
    %v420 = vadd.f32 %v332, %v389
    %v421 = vadd.f32 %v333, %v393
    %v422 = vadd.f32 %v334, %v389
    %v423 = vadd.f32 %v335, %v393
    %v424 = vadd.f32 %v336, %v389
    %v425 = vadd.f32 %v337, %v393
    %v426 = vadd.f32 %v338, %v389
    %v427 = vadd.f32 %v339, %v393
    %v428 = vadd.f32 %v340, %v389
    %v429 = vadd.f32 %v341, %v393
    %v430 = vadd.f32 %v342, %v389
    %v431 = vadd.f32 %v343, %v393
    %v432 = vadd.f32 %v344, %v389
    %v433 = vadd.f32 %v345, %v393
    %v434 = vadd.f32 %v346, %v389
    %v435 = vadd.f32 %v347, %v393
    %v436 = vadd.f32 %v348, %v389
    %v437 = vadd.f32 %v349, %v393
    %v438 = vadd.f32 %v350, %v389
    %v439 = vadd.f32 %v351, %v393
    %v440 = vadd.f32 %v352, %v389
    %v441 = vadd.f32 %v353, %v393
    %v442 = vadd.f32 %v354, %v389
    %v443 = vadd.f32 %v355, %v393
    %v444 = vadd.f32 %v356, %v389
    %v445 = vadd.f32 %v357, %v393
    %v446 = vadd.f32 %v358, %v389
    %v447 = vadd.f32 %v359, %v393
    %v448 = vadd.f32 %v360, %v389
    %v449 = vadd.f32 %v361, %v393
    %v450 = vadd.f32 %v362, %v389
    %v451 = vadd.f32 %v363, %v393
    %v452 = vadd.f32 %v364, %v389
    %v453 = vadd.f32 %v365, %v393
    %v454 = vadd.f32 %v366, %v389
    %v455 = vadd.f32 %v367, %v393
    %v456 = vadd.f32 %v368, %v389
    %v457 = vadd.f32 %v369, %v393
    %v458 = vadd.f32 %v370, %v389
    %v459 = vadd.f32 %v371, %v393
    %v460 = vadd.f32 %v372, %v389
    %v461 = vadd.f32 %v373, %v393
    %v462 = vadd.f32 %v374, %v389
    %v463 = vadd.f32 %v375, %v393
    %v464 = vadd.f32 %v376, %v389
    %v465 = vadd.f32 %v377, %v393
    %v466 = vadd.f32 %v378, %v389
    %v467 = vadd.f32 %v379, %v393
    %v468 = vadd.f32 %v380, %v389
    %v469 = vadd.f32 %v381, %v393
    %v470 = vadd.f32 %v382, %v389
    %v471 = vadd.f32 %v383, %v393
    %v472 = vmul.f32 %v396, 0.01
    %v473 = vmul.f32 %v397, 0.01
    %v474 = vmul.f32 %v398, 0.01
    %v475 = vmul.f32 %v399, 0.01
    %v476 = vmul.f32 %v400, 0.01
    %v477 = vmul.f32 %v401, 0.01
    %v478 = vmul.f32 %v402, 0.01
    %v479 = vmul.f32 %v403, 0.01
    %v480 = vmul.f32 %v404, 0.01
    %v481 = vmul.f32 %v405, 0.01
    %v482 = vmul.f32 %v406, 0.01
    %v483 = vmul.f32 %v407, 0.01
    %v484 = vmul.f32 %v408, 0.01
    %v485 = vmul.f32 %v409, 0.01
    %v486 = vmul.f32 %v410, 0.01
    %v487 = vmul.f32 %v411, 0.01
    %v488 = vmul.f32 %v412, 0.01
    %v489 = vmul.f32 %v413, 0.01
    %v490 = vmul.f32 %v414, 0.01
    %v491 = vmul.f32 %v415, 0.01
    %v492 = vmul.f32 %v416, 0.01
    %v493 = vmul.f32 %v417, 0.01
    %v494 = vmul.f32 %v418, 0.01
    %v495 = vmul.f32 %v419, 0.01
    %v496 = vmul.f32 %v420, 0.01
    %v497 = vmul.f32 %v421, 0.01
    %v498 = vmul.f32 %v422, 0.01
    %v499 = vmul.f32 %v423, 0.01
    %v500 = vmul.f32 %v424, 0.01
    %v501 = vmul.f32 %v425, 0.01
    %v502 = vmul.f32 %v426, 0.01
    %v503 = vmul.f32 %v427, 0.01
    %v504 = vmul.f32 %v428, 0.01
    %v505 = vmul.f32 %v429, 0.01
    %v506 = vmul.f32 %v430, 0.01
    %v507 = vmul.f32 %v431, 0.01
    %v508 = vmul.f32 %v432, 0.01
    %v509 = vmul.f32 %v433, 0.01
    %v510 = vmul.f32 %v434, 0.01
    %v511 = vmul.f32 %v435, 0.01
    %v512 = vmul.f32 %v436, 0.01
    %v513 = vmul.f32 %v437, 0.01
    %v514 = vmul.f32 %v438, 0.01
    %v515 = vmul.f32 %v439, 0.01
    %v516 = vmul.f32 %v440, 0.01
    %v517 = vmul.f32 %v441, 0.01
    %v518 = vmul.f32 %v442, 0.01
    %v519 = vmul.f32 %v443, 0.01
    %v520 = vmul.f32 %v444, 0.01
    %v521 = vmul.f32 %v445, 0.01
    %v522 = vmul.f32 %v446, 0.01
    %v523 = vmul.f32 %v447, 0.01
    %v524 = vmul.f32 %v448, 0.01
    %v525 = vmul.f32 %v449, 0.01
    %v526 = vmul.f32 %v450, 0.01
    %v527 = vmul.f32 %v451, 0.01
    %v528 = vmul.f32 %v452, 0.01
    %v529 = vmul.f32 %v453, 0.01
    %v530 = vmul.f32 %v454, 0.01
    %v531 = vmul.f32 %v455, 0.01
    %v532 = vmul.f32 %v456, 0.01
    %v533 = vmul.f32 %v457, 0.01
    %v534 = vmul.f32 %v458, 0.01
    %v535 = vmul.f32 %v459, 0.01
    %v536 = vmul.f32 %v460, 0.01
    %v537 = vmul.f32 %v461, 0.01
    %v538 = vmul.f32 %v462, 0.01
    %v539 = vmul.f32 %v463, 0.01
    %v540 = vmul.f32 %v464, 0.01
    %v541 = vmul.f32 %v465, 0.01
    %v542 = vmul.f32 %v466, 0.01
    %v543 = vmul.f32 %v467, 0.01
    %v544 = vmul.f32 %v468, 0.01
    %v545 = vmul.f32 %v469, 0.01
    %v546 = vmul.f32 %v470, 0.01
    %v547 = vmul.f32 %v471, 0.01
    %v548 = vmax.f32 %v396, %v472
    %v549 = vmax.f32 %v397, %v473
    %v550 = vmax.f32 %v398, %v474
    %v551 = vmax.f32 %v399, %v475
    %v552 = vmax.f32 %v400, %v476
    %v553 = vmax.f32 %v401, %v477
    %v554 = vmax.f32 %v402, %v478
    %v555 = vmax.f32 %v403, %v479
    %v556 = vmax.f32 %v404, %v480
    %v557 = vmax.f32 %v405, %v481
    %v558 = vmax.f32 %v406, %v482
    %v559 = vmax.f32 %v407, %v483
    %v560 = vmax.f32 %v408, %v484
    %v561 = vmax.f32 %v409, %v485
    %v562 = vmax.f32 %v410, %v486
    %v563 = vmax.f32 %v411, %v487
    %v564 = vmax.f32 %v412, %v488
    %v565 = vmax.f32 %v413, %v489
    %v566 = vmax.f32 %v414, %v490
    %v567 = vmax.f32 %v415, %v491
    %v568 = vmax.f32 %v416, %v492
    %v569 = vmax.f32 %v417, %v493
    %v570 = vmax.f32 %v418, %v494
    %v571 = vmax.f32 %v419, %v495
    %v572 = vmax.f32 %v420, %v496
    %v573 = vmax.f32 %v421, %v497
    %v574 = vmax.f32 %v422, %v498
    %v575 = vmax.f32 %v423, %v499
    %v576 = vmax.f32 %v424, %v500
    %v577 = vmax.f32 %v425, %v501
    %v578 = vmax.f32 %v426, %v502
    %v579 = vmax.f32 %v427, %v503
    %v580 = vmax.f32 %v428, %v504
    %v581 = vmax.f32 %v429, %v505
    %v582 = vmax.f32 %v430, %v506
    %v583 = vmax.f32 %v431, %v507
    %v584 = vmax.f32 %v432, %v508
    %v585 = vmax.f32 %v433, %v509
    %v586 = vmax.f32 %v434, %v510
    %v587 = vmax.f32 %v435, %v511
    %v588 = vmax.f32 %v436, %v512
    %v589 = vmax.f32 %v437, %v513
    %v590 = vmax.f32 %v438, %v514
    %v591 = vmax.f32 %v439, %v515
    %v592 = vmax.f32 %v440, %v516
    %v593 = vmax.f32 %v441, %v517
    %v594 = vmax.f32 %v442, %v518
    %v595 = vmax.f32 %v443, %v519
    %v596 = vmax.f32 %v444, %v520
    %v597 = vmax.f32 %v445, %v521
    %v598 = vmax.f32 %v446, %v522
    %v599 = vmax.f32 %v447, %v523
    %v600 = vmax.f32 %v448, %v524
    %v601 = vmax.f32 %v449, %v525
    %v602 = vmax.f32 %v450, %v526
    %v603 = vmax.f32 %v451, %v527
    %v604 = vmax.f32 %v452, %v528
    %v605 = vmax.f32 %v453, %v529
    %v606 = vmax.f32 %v454, %v530
    %v607 = vmax.f32 %v455, %v531
    %v608 = vmax.f32 %v456, %v532
    %v609 = vmax.f32 %v457, %v533
    %v610 = vmax.f32 %v458, %v534
    %v611 = vmax.f32 %v459, %v535
    %v612 = vmax.f32 %v460, %v536
    %v613 = vmax.f32 %v461, %v537
    %v614 = vmax.f32 %v462, %v538
    %v615 = vmax.f32 %v463, %v539
    %v616 = vmax.f32 %v464, %v540
    %v617 = vmax.f32 %v465, %v541
    %v618 = vmax.f32 %v466, %v542
    %v619 = vmax.f32 %v467, %v543
    %v620 = vmax.f32 %v468, %v544
    %v621 = vmax.f32 %v469, %v545
    %v622 = vmax.f32 %v470, %v546
    %v623 = vmax.f32 %v471, %v547
    %v624 = vld [vmem:[%s3] sm:$0xff]
    %v625 = vld [vmem:[%s3 + $0x8] sm:$0xff]
    %v626 = vld [vmem:[%s3 + $0x10] sm:$0xff]
    %v627 = vld [vmem:[%s3 + $0x18] sm:$0xff]
    %v628 = vld [vmem:[%s3 + $0x20] sm:$0xff]
    %v629 = vld [vmem:[%s3 + $0x28] sm:$0xff]
    %v630 = vld [vmem:[%s3 + $0x30] sm:$0xff]
    %v631 = vld [vmem:[%s3 + $0x38] sm:$0xff]
    %v632 = vld [vmem:[%s3 + $0x40] sm:$0xff]
    %v633 = vld [vmem:[%s3 + $0x48] sm:$0xff]
    %v634 = vld [vmem:[%s3 + $0x50] sm:$0xff]
    %v635 = vld [vmem:[%s3 + $0x58] sm:$0xff]
    %v636 = vld [vmem:[%s3 + $0x60] sm:$0xff]
    %v637 = vld [vmem:[%s3 + $0x68] sm:$0xff]
    %v638 = vld [vmem:[%s3 + $0x70] sm:$0xff]
    %v639 = vld [vmem:[%s3 + $0x78] sm:$0xff]
    %v640 = vld [vmem:[%s3 + $0x80] sm:$0xff]
    %v641 = vld [vmem:[%s3 + $0x88] sm:$0xff]
    %v642 = vld [vmem:[%s3 + $0x90] sm:$0xff]
    %v643 = vld [vmem:[%s3 + $0x98] sm:$0xff]
    %v644 = vld [vmem:[%s3 + $0xa0] sm:$0xff]
    %v645 = vld [vmem:[%s3 + $0xa8] sm:$0xff]
    %v646 = vld [vmem:[%s3 + $0xb0] sm:$0xff]
    %v647 = vld [vmem:[%s3 + $0xb8] sm:$0xff]
    %v648 = vld [vmem:[%s3 + $0xc0] sm:$0xff]
    %v649 = vld [vmem:[%s3 + $0xc8] sm:$0xff]
    %v650 = vld [vmem:[%s3 + $0xd0] sm:$0xff]
    %v651 = vld [vmem:[%s3 + $0xd8] sm:$0xff]
    %v652 = vld [vmem:[%s3 + $0xe0] sm:$0xff]
    %v653 = vld [vmem:[%s3 + $0xe8] sm:$0xff]
    %v654 = vld [vmem:[%s3 + $0xf0] sm:$0xff]
    %v655 = vld [vmem:[%s3 + $0xf8] sm:$0xff]
    %v656 = vld [vmem:[%s3 + $0x100] sm:$0xff]
    %v657 = vld [vmem:[%s3 + $0x108] sm:$0xff]
    %v658 = vld [vmem:[%s3 + $0x110] sm:$0xff]
    %v659 = vld [vmem:[%s3 + $0x118] sm:$0xff]
    %v660 = vld [vmem:[%s3 + $0x120] sm:$0xff]
    %v661 = vld [vmem:[%s3 + $0x128] sm:$0xff]
    %v662 = vld [vmem:[%s3 + $0x130] sm:$0xff]
    %v663 = vld [vmem:[%s3 + $0x138] sm:$0xff]
    %v664 = vld [vmem:[%s3 + $0x140] sm:$0xff]
    %v665 = vld [vmem:[%s3 + $0x148] sm:$0xff]
    %v666 = vld [vmem:[%s3 + $0x150] sm:$0xff]
    %v667 = vld [vmem:[%s3 + $0x158] sm:$0xff]
    %v668 = vld [vmem:[%s3 + $0x160] sm:$0xff]
    %v669 = vld [vmem:[%s3 + $0x168] sm:$0xff]
    %v670 = vld [vmem:[%s3 + $0x170] sm:$0xff]
    %v671 = vld [vmem:[%s3 + $0x178] sm:$0xff]
    %v672 = vld [vmem:[%s3 + $0x180] sm:$0xff]
    %v673 = vld [vmem:[%s3 + $0x188] sm:$0xff]
    %v674 = vld [vmem:[%s3 + $0x190] sm:$0xff]
    %v675 = vld [vmem:[%s3 + $0x198] sm:$0xff]
    %v676 = vld [vmem:[%s3 + $0x1a0] sm:$0xff]
    %v677 = vld [vmem:[%s3 + $0x1a8] sm:$0xff]
    %v678 = vld [vmem:[%s3 + $0x1b0] sm:$0xff]
    %v679 = vld [vmem:[%s3 + $0x1b8] sm:$0xff]
    %v680 = vld [vmem:[%s3 + $0x1c0] sm:$0xff]
    %v681 = vld [vmem:[%s3 + $0x1c8] sm:$0xff]
    %v682 = vld [vmem:[%s3 + $0x1d0] sm:$0xff]
    %v683 = vld [vmem:[%s3 + $0x1d8] sm:$0xff]
    %v684 = vld [vmem:[%s3 + $0x1e0] sm:$0xff]
    %v685 = vld [vmem:[%s3 + $0x1e8] sm:$0xff]
    %v686 = vld [vmem:[%s3 + $0x1f0] sm:$0xff]
    %v687 = vld [vmem:[%s3 + $0x1f8] sm:$0xff]
    %v688 = vld [vmem:[%s4] sm:$0x3]
    %v690 = vlaneseq
    %v691 = vshrl.u32 %v690, 7
    %v692 = vsub.s32 0, %v691
    %v693 = vrot.slane %v688, %v692
    %v694 = vlaneseq
    %v695 = vshrl.u32 %v694, 7
    %v696 = vsub.s32 1, %v695
    %v697 = vrot.slane %v688, %v696
    %700 = vmatprep.subr.mxu0 %v655
    %701 = vmatpush1.msra.mxu0 %v654
    %702 = vmatprep.subr.mxu0 %v653
    %703 = vmatpush1.msra.mxu0 %v652
    %704 = vmatprep.subr.mxu0 %v651
    %705 = vmatpush1.msra.mxu0 %v650
    %706 = vmatprep.subr.mxu0 %v649
    %707 = vmatpush1.msra.mxu0 %v648
    %708 = vmatprep.subr.mxu0 %v647
    %709 = vmatpush1.msra.mxu0 %v646
    %710 = vmatprep.subr.mxu0 %v645
    %711 = vmatpush1.msra.mxu0 %v644
    %712 = vmatprep.subr.mxu0 %v643
    %713 = vmatpush1.msra.mxu0 %v642
    %714 = vmatprep.subr.mxu0 %v641
    %715 = vmatpush1.msra.mxu0 %v640
    %716 = vmatprep.subr.mxu0 %v639
    %717 = vmatpush1.msra.mxu0 %v638
    %718 = vmatprep.subr.mxu0 %v637
    %719 = vmatpush1.msra.mxu0 %v636
    %720 = vmatprep.subr.mxu0 %v635
    %721 = vmatpush1.msra.mxu0 %v634
    %722 = vmatprep.subr.mxu0 %v633
    %723 = vmatpush1.msra.mxu0 %v632
    %724 = vmatprep.subr.mxu0 %v631
    %725 = vmatpush1.msra.mxu0 %v630
    %726 = vmatprep.subr.mxu0 %v629
    %727 = vmatpush1.msra.mxu0 %v628
    %728 = vmatprep.subr.mxu0 %v627
    %729 = vmatpush1.msra.mxu0 %v626
    %730 = vmatprep.subr.mxu0 %v625
    %731 = vmatpush1.msra.mxu0 %v624
    %732 = vmatprep.subr.mxu0 %v687
    %733 = vmatpush2.msra.mxu0 %v686
    %734 = vmatprep.subr.mxu0 %v685
    %735 = vmatpush2.msra.mxu0 %v684
    %736 = vmatprep.subr.mxu0 %v683
    %737 = vmatpush2.msra.mxu0 %v682
    %738 = vmatprep.subr.mxu0 %v681
    %739 = vmatpush2.msra.mxu0 %v680
    %740 = vmatprep.subr.mxu0 %v679
    %741 = vmatpush2.msra.mxu0 %v678
    %742 = vmatprep.subr.mxu0 %v677
    %743 = vmatpush2.msra.mxu0 %v676
    %744 = vmatprep.subr.mxu0 %v675
    %745 = vmatpush2.msra.mxu0 %v674
    %746 = vmatprep.subr.mxu0 %v673
    %747 = vmatpush2.msra.mxu0 %v672
    %748 = vmatprep.subr.mxu0 %v671
    %749 = vmatpush2.msra.mxu0 %v670
    %750 = vmatprep.subr.mxu0 %v669
    %751 = vmatpush2.msra.mxu0 %v668
    %752 = vmatprep.subr.mxu0 %v667
    %753 = vmatpush2.msra.mxu0 %v666
    %754 = vmatprep.subr.mxu0 %v665
    %755 = vmatpush2.msra.mxu0 %v664
    %756 = vmatprep.subr.mxu0 %v663
    %757 = vmatpush2.msra.mxu0 %v662
    %758 = vmatprep.subr.mxu0 %v661
    %759 = vmatpush2.msra.mxu0 %v660
    %760 = vmatprep.subr.mxu0 %v659
    %761 = vmatpush2.msra.mxu0 %v658
    %762 = vmatprep.subr.mxu0 %v657
    %763 = vmatpush2.msra.mxu0 %v656
    %764 = vmatprep.mubr.f32.mxu0 %v549
    %765 = vmatmul.mubr.f32.gmra.mxu0 %v548
    %v766 = vpop.f32.mrf.mxu0
    %v767 = vadd.f32 %v693, %v766
    %v768 = vpop.f32.mrf.mxu0
    %v769 = vadd.f32 %v697, %v768
    %770 = vmatprep.mubr.f32.mxu0 %v551
    %771 = vmatmul.mubr.f32.gmra.mxu0 %v550
    %v772 = vpop.f32.mrf.mxu0
    %v773 = vadd.f32 %v693, %v772
    %v774 = vpop.f32.mrf.mxu0
    %v775 = vadd.f32 %v697, %v774
    %776 = vmatprep.mubr.f32.mxu0 %v553
    %777 = vmatmul.mubr.f32.gmra.mxu0 %v552
    %v778 = vpop.f32.mrf.mxu0
    %v779 = vadd.f32 %v693, %v778
    %v780 = vpop.f32.mrf.mxu0
    %v781 = vadd.f32 %v697, %v780
    %782 = vmatprep.mubr.f32.mxu0 %v555
    %783 = vmatmul.mubr.f32.gmra.mxu0 %v554
    %v784 = vpop.f32.mrf.mxu0
    %v785 = vadd.f32 %v693, %v784
    %v786 = vpop.f32.mrf.mxu0
    %v787 = vadd.f32 %v697, %v786
    %788 = vmatprep.mubr.f32.mxu0 %v557
    %789 = vmatmul.mubr.f32.gmra.mxu0 %v556
    %v790 = vpop.f32.mrf.mxu0
    %v791 = vadd.f32 %v693, %v790
    %v792 = vpop.f32.mrf.mxu0
    %v793 = vadd.f32 %v697, %v792
    %794 = vmatprep.mubr.f32.mxu0 %v559
    %795 = vmatmul.mubr.f32.gmra.mxu0 %v558
    %v796 = vpop.f32.mrf.mxu0
    %v797 = vadd.f32 %v693, %v796
    %v798 = vpop.f32.mrf.mxu0
    %v799 = vadd.f32 %v697, %v798
    %800 = vmatprep.mubr.f32.mxu0 %v561
    %801 = vmatmul.mubr.f32.gmra.mxu0 %v560
    %v802 = vpop.f32.mrf.mxu0
    %v803 = vadd.f32 %v693, %v802
    %v804 = vpop.f32.mrf.mxu0
    %v805 = vadd.f32 %v697, %v804
    %806 = vmatprep.mubr.f32.mxu0 %v563
    %807 = vmatmul.mubr.f32.gmra.mxu0 %v562
    %v808 = vpop.f32.mrf.mxu0
    %v809 = vadd.f32 %v693, %v808
    %v810 = vpop.f32.mrf.mxu0
    %v811 = vadd.f32 %v697, %v810
    %812 = vmatprep.mubr.f32.mxu0 %v565
    %813 = vmatmul.mubr.f32.gmra.mxu0 %v564
    %v814 = vpop.f32.mrf.mxu0
    %v815 = vadd.f32 %v693, %v814
    %v816 = vpop.f32.mrf.mxu0
    %v817 = vadd.f32 %v697, %v816
    %818 = vmatprep.mubr.f32.mxu0 %v567
    %819 = vmatmul.mubr.f32.gmra.mxu0 %v566
    %v820 = vpop.f32.mrf.mxu0
    %v821 = vadd.f32 %v693, %v820
    %v822 = vpop.f32.mrf.mxu0
    %v823 = vadd.f32 %v697, %v822
    %824 = vmatprep.mubr.f32.mxu0 %v569
    %825 = vmatmul.mubr.f32.gmra.mxu0 %v568
    %v826 = vpop.f32.mrf.mxu0
    %v827 = vadd.f32 %v693, %v826
    %v828 = vpop.f32.mrf.mxu0
    %v829 = vadd.f32 %v697, %v828
    %830 = vmatprep.mubr.f32.mxu0 %v571
    %831 = vmatmul.mubr.f32.gmra.mxu0 %v570
    %v832 = vpop.f32.mrf.mxu0
    %v833 = vadd.f32 %v693, %v832
    %v834 = vpop.f32.mrf.mxu0
    %v835 = vadd.f32 %v697, %v834
    %836 = vmatprep.mubr.f32.mxu0 %v573
    %837 = vmatmul.mubr.f32.gmra.mxu0 %v572
    %v838 = vpop.f32.mrf.mxu0
    %v839 = vadd.f32 %v693, %v838
    %v840 = vpop.f32.mrf.mxu0
    %v841 = vadd.f32 %v697, %v840
    %842 = vmatprep.mubr.f32.mxu0 %v575
    %843 = vmatmul.mubr.f32.gmra.mxu0 %v574
    %v844 = vpop.f32.mrf.mxu0
    %v845 = vadd.f32 %v693, %v844
    %v846 = vpop.f32.mrf.mxu0
    %v847 = vadd.f32 %v697, %v846
    %848 = vmatprep.mubr.f32.mxu0 %v577
    %849 = vmatmul.mubr.f32.gmra.mxu0 %v576
    %v850 = vpop.f32.mrf.mxu0
    %v851 = vadd.f32 %v693, %v850
    %v852 = vpop.f32.mrf.mxu0
    %v853 = vadd.f32 %v697, %v852
    %854 = vmatprep.mubr.f32.mxu0 %v579
    %855 = vmatmul.mubr.f32.gmra.mxu0 %v578
    %v856 = vpop.f32.mrf.mxu0
    %v857 = vadd.f32 %v693, %v856
    %v858 = vpop.f32.mrf.mxu0
    %v859 = vadd.f32 %v697, %v858
    %860 = vmatprep.mubr.f32.mxu0 %v581
    %861 = vmatmul.mubr.f32.gmra.mxu0 %v580
    %v862 = vpop.f32.mrf.mxu0
    %v863 = vadd.f32 %v693, %v862
    %v864 = vpop.f32.mrf.mxu0
    %v865 = vadd.f32 %v697, %v864
    %866 = vmatprep.mubr.f32.mxu0 %v583
    %867 = vmatmul.mubr.f32.gmra.mxu0 %v582
    %v868 = vpop.f32.mrf.mxu0
    %v869 = vadd.f32 %v693, %v868
    %v870 = vpop.f32.mrf.mxu0
    %v871 = vadd.f32 %v697, %v870
    %872 = vmatprep.mubr.f32.mxu0 %v585
    %873 = vmatmul.mubr.f32.gmra.mxu0 %v584
    %v874 = vpop.f32.mrf.mxu0
    %v875 = vadd.f32 %v693, %v874
    %v876 = vpop.f32.mrf.mxu0
    %v877 = vadd.f32 %v697, %v876
    %878 = vmatprep.mubr.f32.mxu0 %v587
    %879 = vmatmul.mubr.f32.gmra.mxu0 %v586
    %v880 = vpop.f32.mrf.mxu0
    %v881 = vadd.f32 %v693, %v880
    %v882 = vpop.f32.mrf.mxu0
    %v883 = vadd.f32 %v697, %v882
    %884 = vmatprep.mubr.f32.mxu0 %v589
    %885 = vmatmul.mubr.f32.gmra.mxu0 %v588
    %v886 = vpop.f32.mrf.mxu0
    %v887 = vadd.f32 %v693, %v886
    %v888 = vpop.f32.mrf.mxu0
    %v889 = vadd.f32 %v697, %v888
    %890 = vmatprep.mubr.f32.mxu0 %v591
    %891 = vmatmul.mubr.f32.gmra.mxu0 %v590
    %v892 = vpop.f32.mrf.mxu0
    %v893 = vadd.f32 %v693, %v892
    %v894 = vpop.f32.mrf.mxu0
    %v895 = vadd.f32 %v697, %v894
    %896 = vmatprep.mubr.f32.mxu0 %v593
    %897 = vmatmul.mubr.f32.gmra.mxu0 %v592
    %v898 = vpop.f32.mrf.mxu0
    %v899 = vadd.f32 %v693, %v898
    %v900 = vpop.f32.mrf.mxu0
    %v901 = vadd.f32 %v697, %v900
    %902 = vmatprep.mubr.f32.mxu0 %v595
    %903 = vmatmul.mubr.f32.gmra.mxu0 %v594
    %v904 = vpop.f32.mrf.mxu0
    %v905 = vadd.f32 %v693, %v904
    %v906 = vpop.f32.mrf.mxu0
    %v907 = vadd.f32 %v697, %v906
    %908 = vmatprep.mubr.f32.mxu0 %v597
    %909 = vmatmul.mubr.f32.gmra.mxu0 %v596
    %v910 = vpop.f32.mrf.mxu0
    %v911 = vadd.f32 %v693, %v910
    %v912 = vpop.f32.mrf.mxu0
    %v913 = vadd.f32 %v697, %v912
    %914 = vmatprep.mubr.f32.mxu0 %v599
    %915 = vmatmul.mubr.f32.gmra.mxu0 %v598
    %v916 = vpop.f32.mrf.mxu0
    %v917 = vadd.f32 %v693, %v916
    %v918 = vpop.f32.mrf.mxu0
    %v919 = vadd.f32 %v697, %v918
    %920 = vmatprep.mubr.f32.mxu0 %v601
    %921 = vmatmul.mubr.f32.gmra.mxu0 %v600
    %v922 = vpop.f32.mrf.mxu0
    %v923 = vadd.f32 %v693, %v922
    %v924 = vpop.f32.mrf.mxu0
    %v925 = vadd.f32 %v697, %v924
    %926 = vmatprep.mubr.f32.mxu0 %v603
    %927 = vmatmul.mubr.f32.gmra.mxu0 %v602
    %v928 = vpop.f32.mrf.mxu0
    %v929 = vadd.f32 %v693, %v928
    %v930 = vpop.f32.mrf.mxu0
    %v931 = vadd.f32 %v697, %v930
    %932 = vmatprep.mubr.f32.mxu0 %v605
    %933 = vmatmul.mubr.f32.gmra.mxu0 %v604
    %v934 = vpop.f32.mrf.mxu0
    %v935 = vadd.f32 %v693, %v934
    %v936 = vpop.f32.mrf.mxu0
    %v937 = vadd.f32 %v697, %v936
    %938 = vmatprep.mubr.f32.mxu0 %v607
    %939 = vmatmul.mubr.f32.gmra.mxu0 %v606
    %v940 = vpop.f32.mrf.mxu0
    %v941 = vadd.f32 %v693, %v940
    %v942 = vpop.f32.mrf.mxu0
    %v943 = vadd.f32 %v697, %v942
    %944 = vmatprep.mubr.f32.mxu0 %v609
    %945 = vmatmul.mubr.f32.gmra.mxu0 %v608
    %v946 = vpop.f32.mrf.mxu0
    %v947 = vadd.f32 %v693, %v946
    %v948 = vpop.f32.mrf.mxu0
    %v949 = vadd.f32 %v697, %v948
    %950 = vmatprep.mubr.f32.mxu0 %v611
    %951 = vmatmul.mubr.f32.gmra.mxu0 %v610
    %v952 = vpop.f32.mrf.mxu0
    %v953 = vadd.f32 %v693, %v952
    %v954 = vpop.f32.mrf.mxu0
    %v955 = vadd.f32 %v697, %v954
    %956 = vmatprep.mubr.f32.mxu0 %v613
    %957 = vmatmul.mubr.f32.gmra.mxu0 %v612
    %v958 = vpop.f32.mrf.mxu0
    %v959 = vadd.f32 %v693, %v958
    %v960 = vpop.f32.mrf.mxu0
    %v961 = vadd.f32 %v697, %v960
    %962 = vmatprep.mubr.f32.mxu0 %v615
    %963 = vmatmul.mubr.f32.gmra.mxu0 %v614
    %v964 = vpop.f32.mrf.mxu0
    %v965 = vadd.f32 %v693, %v964
    %v966 = vpop.f32.mrf.mxu0
    %v967 = vadd.f32 %v697, %v966
    %968 = vmatprep.mubr.f32.mxu0 %v617
    %969 = vmatmul.mubr.f32.gmra.mxu0 %v616
    %v970 = vpop.f32.mrf.mxu0
    %v971 = vadd.f32 %v693, %v970
    %v972 = vpop.f32.mrf.mxu0
    %v973 = vadd.f32 %v697, %v972
    %974 = vmatprep.mubr.f32.mxu0 %v619
    %975 = vmatmul.mubr.f32.gmra.mxu0 %v618
    %v976 = vpop.f32.mrf.mxu0
    %v977 = vadd.f32 %v693, %v976
    %v978 = vpop.f32.mrf.mxu0
    %v979 = vadd.f32 %v697, %v978
    %980 = vmatprep.mubr.f32.mxu0 %v621
    %981 = vmatmul.mubr.f32.gmra.mxu0 %v620
    %v982 = vpop.f32.mrf.mxu0
    %v983 = vadd.f32 %v693, %v982
    %v984 = vpop.f32.mrf.mxu0
    %v985 = vadd.f32 %v697, %v984
    %986 = vmatprep.mubr.f32.mxu0 %v623
    %987 = vmatmul.mubr.f32.gmra.mxu0 %v622
    %v988 = vpop.f32.mrf.mxu0
    %v989 = vadd.f32 %v693, %v988
    %v990 = vpop.f32.mrf.mxu0
    %v991 = vadd.f32 %v697, %v990
    %992 = vdwg.mxu0
    %v993 = vmul.f32 %v767, 0.01
    %v994 = vmul.f32 %v769, 0.01
    %v995 = vmul.f32 %v773, 0.01
    %v996 = vmul.f32 %v775, 0.01
    %v997 = vmul.f32 %v779, 0.01
    %v998 = vmul.f32 %v781, 0.01
    %v999 = vmul.f32 %v785, 0.01
    %v1000 = vmul.f32 %v787, 0.01
    %v1001 = vmul.f32 %v791, 0.01
    %v1002 = vmul.f32 %v793, 0.01
    %v1003 = vmul.f32 %v797, 0.01
    %v1004 = vmul.f32 %v799, 0.01
    %v1005 = vmul.f32 %v803, 0.01
    %v1006 = vmul.f32 %v805, 0.01
    %v1007 = vmul.f32 %v809, 0.01
    %v1008 = vmul.f32 %v811, 0.01
    %v1009 = vmul.f32 %v815, 0.01
    %v1010 = vmul.f32 %v817, 0.01
    %v1011 = vmul.f32 %v821, 0.01
    %v1012 = vmul.f32 %v823, 0.01
    %v1013 = vmul.f32 %v827, 0.01
    %v1014 = vmul.f32 %v829, 0.01
    %v1015 = vmul.f32 %v833, 0.01
    %v1016 = vmul.f32 %v835, 0.01
    %v1017 = vmul.f32 %v839, 0.01
    %v1018 = vmul.f32 %v841, 0.01
    %v1019 = vmul.f32 %v845, 0.01
    %v1020 = vmul.f32 %v847, 0.01
    %v1021 = vmul.f32 %v851, 0.01
    %v1022 = vmul.f32 %v853, 0.01
    %v1023 = vmul.f32 %v857, 0.01
    %v1024 = vmul.f32 %v859, 0.01
    %v1025 = vmul.f32 %v863, 0.01
    %v1026 = vmul.f32 %v865, 0.01
    %v1027 = vmul.f32 %v869, 0.01
    %v1028 = vmul.f32 %v871, 0.01
    %v1029 = vmul.f32 %v875, 0.01
    %v1030 = vmul.f32 %v877, 0.01
    %v1031 = vmul.f32 %v881, 0.01
    %v1032 = vmul.f32 %v883, 0.01
    %v1033 = vmul.f32 %v887, 0.01
    %v1034 = vmul.f32 %v889, 0.01
    %v1035 = vmul.f32 %v893, 0.01
    %v1036 = vmul.f32 %v895, 0.01
    %v1037 = vmul.f32 %v899, 0.01
    %v1038 = vmul.f32 %v901, 0.01
    %v1039 = vmul.f32 %v905, 0.01
    %v1040 = vmul.f32 %v907, 0.01
    %v1041 = vmul.f32 %v911, 0.01
    %v1042 = vmul.f32 %v913, 0.01
    %v1043 = vmul.f32 %v917, 0.01
    %v1044 = vmul.f32 %v919, 0.01
    %v1045 = vmul.f32 %v923, 0.01
    %v1046 = vmul.f32 %v925, 0.01
    %v1047 = vmul.f32 %v929, 0.01
    %v1048 = vmul.f32 %v931, 0.01
    %v1049 = vmul.f32 %v935, 0.01
    %v1050 = vmul.f32 %v937, 0.01
    %v1051 = vmul.f32 %v941, 0.01
    %v1052 = vmul.f32 %v943, 0.01
    %v1053 = vmul.f32 %v947, 0.01
    %v1054 = vmul.f32 %v949, 0.01
    %v1055 = vmul.f32 %v953, 0.01
    %v1056 = vmul.f32 %v955, 0.01
    %v1057 = vmul.f32 %v959, 0.01
    %v1058 = vmul.f32 %v961, 0.01
    %v1059 = vmul.f32 %v965, 0.01
    %v1060 = vmul.f32 %v967, 0.01
    %v1061 = vmul.f32 %v971, 0.01
    %v1062 = vmul.f32 %v973, 0.01
    %v1063 = vmul.f32 %v977, 0.01
    %v1064 = vmul.f32 %v979, 0.01
    %v1065 = vmul.f32 %v983, 0.01
    %v1066 = vmul.f32 %v985, 0.01
    %v1067 = vmul.f32 %v989, 0.01
    %v1068 = vmul.f32 %v991, 0.01
    %v1069 = vmax.f32 %v767, %v993
    %v1070 = vmax.f32 %v769, %v994
    %v1071 = vmax.f32 %v773, %v995
    %v1072 = vmax.f32 %v775, %v996
    %v1073 = vmax.f32 %v779, %v997
    %v1074 = vmax.f32 %v781, %v998
    %v1075 = vmax.f32 %v785, %v999
    %v1076 = vmax.f32 %v787, %v1000
    %v1077 = vmax.f32 %v791, %v1001
    %v1078 = vmax.f32 %v793, %v1002
    %v1079 = vmax.f32 %v797, %v1003
    %v1080 = vmax.f32 %v799, %v1004
    %v1081 = vmax.f32 %v803, %v1005
    %v1082 = vmax.f32 %v805, %v1006
    %v1083 = vmax.f32 %v809, %v1007
    %v1084 = vmax.f32 %v811, %v1008
    %v1085 = vmax.f32 %v815, %v1009
    %v1086 = vmax.f32 %v817, %v1010
    %v1087 = vmax.f32 %v821, %v1011
    %v1088 = vmax.f32 %v823, %v1012
    %v1089 = vmax.f32 %v827, %v1013
    %v1090 = vmax.f32 %v829, %v1014
    %v1091 = vmax.f32 %v833, %v1015
    %v1092 = vmax.f32 %v835, %v1016
    %v1093 = vmax.f32 %v839, %v1017
    %v1094 = vmax.f32 %v841, %v1018
    %v1095 = vmax.f32 %v845, %v1019
    %v1096 = vmax.f32 %v847, %v1020
    %v1097 = vmax.f32 %v851, %v1021
    %v1098 = vmax.f32 %v853, %v1022
    %v1099 = vmax.f32 %v857, %v1023
    %v1100 = vmax.f32 %v859, %v1024
    %v1101 = vmax.f32 %v863, %v1025
    %v1102 = vmax.f32 %v865, %v1026
    %v1103 = vmax.f32 %v869, %v1027
    %v1104 = vmax.f32 %v871, %v1028
    %v1105 = vmax.f32 %v875, %v1029
    %v1106 = vmax.f32 %v877, %v1030
    %v1107 = vmax.f32 %v881, %v1031
    %v1108 = vmax.f32 %v883, %v1032
    %v1109 = vmax.f32 %v887, %v1033
    %v1110 = vmax.f32 %v889, %v1034
    %v1111 = vmax.f32 %v893, %v1035
    %v1112 = vmax.f32 %v895, %v1036
    %v1113 = vmax.f32 %v899, %v1037
    %v1114 = vmax.f32 %v901, %v1038
    %v1115 = vmax.f32 %v905, %v1039
    %v1116 = vmax.f32 %v907, %v1040
    %v1117 = vmax.f32 %v911, %v1041
    %v1118 = vmax.f32 %v913, %v1042
    %v1119 = vmax.f32 %v917, %v1043
    %v1120 = vmax.f32 %v919, %v1044
    %v1121 = vmax.f32 %v923, %v1045
    %v1122 = vmax.f32 %v925, %v1046
    %v1123 = vmax.f32 %v929, %v1047
    %v1124 = vmax.f32 %v931, %v1048
    %v1125 = vmax.f32 %v935, %v1049
    %v1126 = vmax.f32 %v937, %v1050
    %v1127 = vmax.f32 %v941, %v1051
    %v1128 = vmax.f32 %v943, %v1052
    %v1129 = vmax.f32 %v947, %v1053
    %v1130 = vmax.f32 %v949, %v1054
    %v1131 = vmax.f32 %v953, %v1055
    %v1132 = vmax.f32 %v955, %v1056
    %v1133 = vmax.f32 %v959, %v1057
    %v1134 = vmax.f32 %v961, %v1058
    %v1135 = vmax.f32 %v965, %v1059
    %v1136 = vmax.f32 %v967, %v1060
    %v1137 = vmax.f32 %v971, %v1061
    %v1138 = vmax.f32 %v973, %v1062
    %v1139 = vmax.f32 %v977, %v1063
    %v1140 = vmax.f32 %v979, %v1064
    %v1141 = vmax.f32 %v983, %v1065
    %v1142 = vmax.f32 %v985, %v1066
    %v1143 = vmax.f32 %v989, %v1067
    %v1144 = vmax.f32 %v991, %v1068
    %v1145 = vld [vmem:[#allocation3] sm:$0xff]
    %v1146 = vld [vmem:[#allocation3 + $0x8] sm:$0xff]
    %v1147 = vld [vmem:[#allocation3 + $0x10] sm:$0xff]
    %v1148 = vld [vmem:[#allocation3 + $0x18] sm:$0xff]
    %v1149 = vld [vmem:[#allocation3 + $0x20] sm:$0xff]
    %v1150 = vld [vmem:[#allocation3 + $0x28] sm:$0xff]
    %v1151 = vld [vmem:[#allocation3 + $0x30] sm:$0xff]
    %v1152 = vld [vmem:[#allocation3 + $0x38] sm:$0xff]
    %v1153 = vld [vmem:[#allocation3 + $0x40] sm:$0xff]
    %v1154 = vld [vmem:[#allocation3 + $0x48] sm:$0xff]
    %v1155 = vld [vmem:[#allocation3 + $0x50] sm:$0xff]
    %v1156 = vld [vmem:[#allocation3 + $0x58] sm:$0xff]
    %v1157 = vld [vmem:[#allocation3 + $0x60] sm:$0xff]
    %v1158 = vld [vmem:[#allocation3 + $0x68] sm:$0xff]
    %v1159 = vld [vmem:[#allocation3 + $0x70] sm:$0xff]
    %v1160 = vld [vmem:[#allocation3 + $0x78] sm:$0xff]
    %v1161 = vld [vmem:[#allocation3 + $0x80] sm:$0xff]
    %v1162 = vld [vmem:[#allocation3 + $0x88] sm:$0xff]
    %v1163 = vld [vmem:[#allocation3 + $0x90] sm:$0xff]
    %v1164 = vld [vmem:[#allocation3 + $0x98] sm:$0xff]
    %v1165 = vld [vmem:[#allocation3 + $0xa0] sm:$0xff]
    %v1166 = vld [vmem:[#allocation3 + $0xa8] sm:$0xff]
    %v1167 = vld [vmem:[#allocation3 + $0xb0] sm:$0xff]
    %v1168 = vld [vmem:[#allocation3 + $0xb8] sm:$0xff]
    %v1169 = vld [vmem:[#allocation3 + $0xc0] sm:$0xff]
    %v1170 = vld [vmem:[#allocation3 + $0xc8] sm:$0xff]
    %v1171 = vld [vmem:[#allocation3 + $0xd0] sm:$0xff]
    %v1172 = vld [vmem:[#allocation3 + $0xd8] sm:$0xff]
    %v1173 = vld [vmem:[#allocation3 + $0xe0] sm:$0xff]
    %v1174 = vld [vmem:[#allocation3 + $0xe8] sm:$0xff]
    %v1175 = vld [vmem:[#allocation3 + $0xf0] sm:$0xff]
    %v1176 = vld [vmem:[#allocation3 + $0xf8] sm:$0xff]
    %v1177 = vld [vmem:[#allocation3 + $0x100] sm:$0xff]
    %v1178 = vld [vmem:[#allocation3 + $0x108] sm:$0xff]
    %v1179 = vld [vmem:[#allocation3 + $0x110] sm:$0xff]
    %v1180 = vld [vmem:[#allocation3 + $0x118] sm:$0xff]
    %v1181 = vld [vmem:[#allocation3 + $0x120] sm:$0xff]
    %v1182 = vld [vmem:[#allocation3 + $0x128] sm:$0xff]
    %v1183 = vld [vmem:[#allocation3 + $0x130] sm:$0xff]
    %v1184 = vld [vmem:[#allocation3 + $0x138] sm:$0xff]
    %v1185 = vld [vmem:[#allocation3 + $0x140] sm:$0xff]
    %v1186 = vld [vmem:[#allocation3 + $0x148] sm:$0xff]
    %v1187 = vld [vmem:[#allocation3 + $0x150] sm:$0xff]
    %v1188 = vld [vmem:[#allocation3 + $0x158] sm:$0xff]
    %v1189 = vld [vmem:[#allocation3 + $0x160] sm:$0xff]
    %v1190 = vld [vmem:[#allocation3 + $0x168] sm:$0xff]
    %v1191 = vld [vmem:[#allocation3 + $0x170] sm:$0xff]
    %v1192 = vld [vmem:[#allocation3 + $0x178] sm:$0xff]
    %v1193 = vld [vmem:[#allocation3 + $0x180] sm:$0xff]
    %v1194 = vld [vmem:[#allocation3 + $0x188] sm:$0xff]
    %v1195 = vld [vmem:[#allocation3 + $0x190] sm:$0xff]
    %v1196 = vld [vmem:[#allocation3 + $0x198] sm:$0xff]
    %v1197 = vld [vmem:[#allocation3 + $0x1a0] sm:$0xff]
    %v1198 = vld [vmem:[#allocation3 + $0x1a8] sm:$0xff]
    %v1199 = vld [vmem:[#allocation3 + $0x1b0] sm:$0xff]
    %v1200 = vld [vmem:[#allocation3 + $0x1b8] sm:$0xff]
    %v1201 = vld [vmem:[#allocation3 + $0x1c0] sm:$0xff]
    %v1202 = vld [vmem:[#allocation3 + $0x1c8] sm:$0xff]
    %v1203 = vld [vmem:[#allocation3 + $0x1d0] sm:$0xff]
    %v1204 = vld [vmem:[#allocation3 + $0x1d8] sm:$0xff]
    %v1205 = vld [vmem:[#allocation3 + $0x1e0] sm:$0xff]
    %v1206 = vld [vmem:[#allocation3 + $0x1e8] sm:$0xff]
    %v1207 = vld [vmem:[#allocation3 + $0x1f0] sm:$0xff]
    %v1208 = vld [vmem:[#allocation3 + $0x1f8] sm:$0xff]
    %v1209 = vld [vmem:[%s6] sm:$0x3]
    %v1211 = vlaneseq
    %v1212 = vshrl.u32 %v1211, 7
    %v1213 = vsub.s32 0, %v1212
    %v1214 = vrot.slane %v1209, %v1213
    %v1215 = vlaneseq
    %v1216 = vshrl.u32 %v1215, 7
    %v1217 = vsub.s32 1, %v1216
    %v1218 = vrot.slane %v1209, %v1217
    %1221 = vmatprep.subr.mxu0 %v1176
    %1222 = vmatpush1.msra.mxu0 %v1175
    %1223 = vmatprep.subr.mxu0 %v1174
    %1224 = vmatpush1.msra.mxu0 %v1173
    %1225 = vmatprep.subr.mxu0 %v1172
    %1226 = vmatpush1.msra.mxu0 %v1171
    %1227 = vmatprep.subr.mxu0 %v1170
    %1228 = vmatpush1.msra.mxu0 %v1169
    %1229 = vmatprep.subr.mxu0 %v1168
    %1230 = vmatpush1.msra.mxu0 %v1167
    %1231 = vmatprep.subr.mxu0 %v1166
    %1232 = vmatpush1.msra.mxu0 %v1165
    %1233 = vmatprep.subr.mxu0 %v1164
    %1234 = vmatpush1.msra.mxu0 %v1163
    %1235 = vmatprep.subr.mxu0 %v1162
    %1236 = vmatpush1.msra.mxu0 %v1161
    %1237 = vmatprep.subr.mxu0 %v1160
    %1238 = vmatpush1.msra.mxu0 %v1159
    %1239 = vmatprep.subr.mxu0 %v1158
    %1240 = vmatpush1.msra.mxu0 %v1157
    %1241 = vmatprep.subr.mxu0 %v1156
    %1242 = vmatpush1.msra.mxu0 %v1155
    %1243 = vmatprep.subr.mxu0 %v1154
    %1244 = vmatpush1.msra.mxu0 %v1153
    %1245 = vmatprep.subr.mxu0 %v1152
    %1246 = vmatpush1.msra.mxu0 %v1151
    %1247 = vmatprep.subr.mxu0 %v1150
    %1248 = vmatpush1.msra.mxu0 %v1149
    %1249 = vmatprep.subr.mxu0 %v1148
    %1250 = vmatpush1.msra.mxu0 %v1147
    %1251 = vmatprep.subr.mxu0 %v1146
    %1252 = vmatpush1.msra.mxu0 %v1145
    %1253 = vmatprep.subr.mxu0 %v1208
    %1254 = vmatpush2.msra.mxu0 %v1207
    %1255 = vmatprep.subr.mxu0 %v1206
    %1256 = vmatpush2.msra.mxu0 %v1205
    %1257 = vmatprep.subr.mxu0 %v1204
    %1258 = vmatpush2.msra.mxu0 %v1203
    %1259 = vmatprep.subr.mxu0 %v1202
    %1260 = vmatpush2.msra.mxu0 %v1201
    %1261 = vmatprep.subr.mxu0 %v1200
    %1262 = vmatpush2.msra.mxu0 %v1199
    %1263 = vmatprep.subr.mxu0 %v1198
    %1264 = vmatpush2.msra.mxu0 %v1197
    %1265 = vmatprep.subr.mxu0 %v1196
    %1266 = vmatpush2.msra.mxu0 %v1195
    %1267 = vmatprep.subr.mxu0 %v1194
    %1268 = vmatpush2.msra.mxu0 %v1193
    %1269 = vmatprep.subr.mxu0 %v1192
    %1270 = vmatpush2.msra.mxu0 %v1191
    %1271 = vmatprep.subr.mxu0 %v1190
    %1272 = vmatpush2.msra.mxu0 %v1189
    %1273 = vmatprep.subr.mxu0 %v1188
    %1274 = vmatpush2.msra.mxu0 %v1187
    %1275 = vmatprep.subr.mxu0 %v1186
    %1276 = vmatpush2.msra.mxu0 %v1185
    %1277 = vmatprep.subr.mxu0 %v1184
    %1278 = vmatpush2.msra.mxu0 %v1183
    %1279 = vmatprep.subr.mxu0 %v1182
    %1280 = vmatpush2.msra.mxu0 %v1181
    %1281 = vmatprep.subr.mxu0 %v1180
    %1282 = vmatpush2.msra.mxu0 %v1179
    %1283 = vmatprep.subr.mxu0 %v1178
    %1284 = vmatpush2.msra.mxu0 %v1177
    %1285 = vmatprep.mubr.f32.mxu0 %v1070
    %1286 = vmatmul.mubr.f32.gmra.mxu0 %v1069
    %v1287 = vpop.f32.mrf.mxu0
    %v1288 = vadd.f32 %v1214, %v1287
    %v1289 = vpop.f32.mrf.mxu0
    %v1290 = vadd.f32 %v1218, %v1289
    %1291 = vmatprep.mubr.f32.mxu0 %v1072
    %1292 = vmatmul.mubr.f32.gmra.mxu0 %v1071
    %v1293 = vpop.f32.mrf.mxu0
    %v1294 = vadd.f32 %v1214, %v1293
    %v1295 = vpop.f32.mrf.mxu0
    %v1296 = vadd.f32 %v1218, %v1295
    %1297 = vmatprep.mubr.f32.mxu0 %v1074
    %1298 = vmatmul.mubr.f32.gmra.mxu0 %v1073
    %v1299 = vpop.f32.mrf.mxu0
    %v1300 = vadd.f32 %v1214, %v1299
    %v1301 = vpop.f32.mrf.mxu0
    %v1302 = vadd.f32 %v1218, %v1301
    %1303 = vmatprep.mubr.f32.mxu0 %v1076
    %1304 = vmatmul.mubr.f32.gmra.mxu0 %v1075
    %v1305 = vpop.f32.mrf.mxu0
    %v1306 = vadd.f32 %v1214, %v1305
    %v1307 = vpop.f32.mrf.mxu0
    %v1308 = vadd.f32 %v1218, %v1307
    %1309 = vmatprep.mubr.f32.mxu0 %v1078
    %1310 = vmatmul.mubr.f32.gmra.mxu0 %v1077
    %v1311 = vpop.f32.mrf.mxu0
    %v1312 = vadd.f32 %v1214, %v1311
    %v1313 = vpop.f32.mrf.mxu0
    %v1314 = vadd.f32 %v1218, %v1313
    %1315 = vmatprep.mubr.f32.mxu0 %v1080
    %1316 = vmatmul.mubr.f32.gmra.mxu0 %v1079
    %v1317 = vpop.f32.mrf.mxu0
    %v1318 = vadd.f32 %v1214, %v1317
    %v1319 = vpop.f32.mrf.mxu0
    %v1320 = vadd.f32 %v1218, %v1319
    %1321 = vmatprep.mubr.f32.mxu0 %v1082
    %1322 = vmatmul.mubr.f32.gmra.mxu0 %v1081
    %v1323 = vpop.f32.mrf.mxu0
    %v1324 = vadd.f32 %v1214, %v1323
    %v1325 = vpop.f32.mrf.mxu0
    %v1326 = vadd.f32 %v1218, %v1325
    %1327 = vmatprep.mubr.f32.mxu0 %v1084
    %1328 = vmatmul.mubr.f32.gmra.mxu0 %v1083
    %v1329 = vpop.f32.mrf.mxu0
    %v1330 = vadd.f32 %v1214, %v1329
    %v1331 = vpop.f32.mrf.mxu0
    %v1332 = vadd.f32 %v1218, %v1331
    %1333 = vmatprep.mubr.f32.mxu0 %v1086
    %1334 = vmatmul.mubr.f32.gmra.mxu0 %v1085
    %v1335 = vpop.f32.mrf.mxu0
    %v1336 = vadd.f32 %v1214, %v1335
    %v1337 = vpop.f32.mrf.mxu0
    %v1338 = vadd.f32 %v1218, %v1337
    %1339 = vmatprep.mubr.f32.mxu0 %v1088
    %1340 = vmatmul.mubr.f32.gmra.mxu0 %v1087
    %v1341 = vpop.f32.mrf.mxu0
    %v1342 = vadd.f32 %v1214, %v1341
    %v1343 = vpop.f32.mrf.mxu0
    %v1344 = vadd.f32 %v1218, %v1343
    %1345 = vmatprep.mubr.f32.mxu0 %v1090
    %1346 = vmatmul.mubr.f32.gmra.mxu0 %v1089
    %v1347 = vpop.f32.mrf.mxu0
    %v1348 = vadd.f32 %v1214, %v1347
    %v1349 = vpop.f32.mrf.mxu0
    %v1350 = vadd.f32 %v1218, %v1349
    %1351 = vmatprep.mubr.f32.mxu0 %v1092
    %1352 = vmatmul.mubr.f32.gmra.mxu0 %v1091
    %v1353 = vpop.f32.mrf.mxu0
    %v1354 = vadd.f32 %v1214, %v1353
    %v1355 = vpop.f32.mrf.mxu0
    %v1356 = vadd.f32 %v1218, %v1355
    %1357 = vmatprep.mubr.f32.mxu0 %v1094
    %1358 = vmatmul.mubr.f32.gmra.mxu0 %v1093
    %v1359 = vpop.f32.mrf.mxu0
    %v1360 = vadd.f32 %v1214, %v1359
    %v1361 = vpop.f32.mrf.mxu0
    %v1362 = vadd.f32 %v1218, %v1361
    %1363 = vmatprep.mubr.f32.mxu0 %v1096
    %1364 = vmatmul.mubr.f32.gmra.mxu0 %v1095
    %v1365 = vpop.f32.mrf.mxu0
    %v1366 = vadd.f32 %v1214, %v1365
    %v1367 = vpop.f32.mrf.mxu0
    %v1368 = vadd.f32 %v1218, %v1367
    %1369 = vmatprep.mubr.f32.mxu0 %v1098
    %1370 = vmatmul.mubr.f32.gmra.mxu0 %v1097
    %v1371 = vpop.f32.mrf.mxu0
    %v1372 = vadd.f32 %v1214, %v1371
    %v1373 = vpop.f32.mrf.mxu0
    %v1374 = vadd.f32 %v1218, %v1373
    %1375 = vmatprep.mubr.f32.mxu0 %v1100
    %1376 = vmatmul.mubr.f32.gmra.mxu0 %v1099
    %v1377 = vpop.f32.mrf.mxu0
    %v1378 = vadd.f32 %v1214, %v1377
    %v1379 = vpop.f32.mrf.mxu0
    %v1380 = vadd.f32 %v1218, %v1379
    %1381 = vmatprep.mubr.f32.mxu0 %v1102
    %1382 = vmatmul.mubr.f32.gmra.mxu0 %v1101
    %v1383 = vpop.f32.mrf.mxu0
    %v1384 = vadd.f32 %v1214, %v1383
    %v1385 = vpop.f32.mrf.mxu0
    %v1386 = vadd.f32 %v1218, %v1385
    %1387 = vmatprep.mubr.f32.mxu0 %v1104
    %1388 = vmatmul.mubr.f32.gmra.mxu0 %v1103
    %v1389 = vpop.f32.mrf.mxu0
    %v1390 = vadd.f32 %v1214, %v1389
    %v1391 = vpop.f32.mrf.mxu0
    %v1392 = vadd.f32 %v1218, %v1391
    %1393 = vmatprep.mubr.f32.mxu0 %v1106
    %1394 = vmatmul.mubr.f32.gmra.mxu0 %v1105
    %v1395 = vpop.f32.mrf.mxu0
    %v1396 = vadd.f32 %v1214, %v1395
    %v1397 = vpop.f32.mrf.mxu0
    %v1398 = vadd.f32 %v1218, %v1397
    %1399 = vmatprep.mubr.f32.mxu0 %v1108
    %1400 = vmatmul.mubr.f32.gmra.mxu0 %v1107
    %v1401 = vpop.f32.mrf.mxu0
    %v1402 = vadd.f32 %v1214, %v1401
    %v1403 = vpop.f32.mrf.mxu0
    %v1404 = vadd.f32 %v1218, %v1403
    %1405 = vmatprep.mubr.f32.mxu0 %v1110
    %1406 = vmatmul.mubr.f32.gmra.mxu0 %v1109
    %v1407 = vpop.f32.mrf.mxu0
    %v1408 = vadd.f32 %v1214, %v1407
    %v1409 = vpop.f32.mrf.mxu0
    %v1410 = vadd.f32 %v1218, %v1409
    %1411 = vmatprep.mubr.f32.mxu0 %v1112
    %1412 = vmatmul.mubr.f32.gmra.mxu0 %v1111
    %v1413 = vpop.f32.mrf.mxu0
    %v1414 = vadd.f32 %v1214, %v1413
    %v1415 = vpop.f32.mrf.mxu0
    %v1416 = vadd.f32 %v1218, %v1415
    %1417 = vmatprep.mubr.f32.mxu0 %v1114
    %1418 = vmatmul.mubr.f32.gmra.mxu0 %v1113
    %v1419 = vpop.f32.mrf.mxu0
    %v1420 = vadd.f32 %v1214, %v1419
    %v1421 = vpop.f32.mrf.mxu0
    %v1422 = vadd.f32 %v1218, %v1421
    %1423 = vmatprep.mubr.f32.mxu0 %v1116
    %1424 = vmatmul.mubr.f32.gmra.mxu0 %v1115
    %v1425 = vpop.f32.mrf.mxu0
    %v1426 = vadd.f32 %v1214, %v1425
    %v1427 = vpop.f32.mrf.mxu0
    %v1428 = vadd.f32 %v1218, %v1427
    %1429 = vmatprep.mubr.f32.mxu0 %v1118
    %1430 = vmatmul.mubr.f32.gmra.mxu0 %v1117
    %v1431 = vpop.f32.mrf.mxu0
    %v1432 = vadd.f32 %v1214, %v1431
    %v1433 = vpop.f32.mrf.mxu0
    %v1434 = vadd.f32 %v1218, %v1433
    %1435 = vmatprep.mubr.f32.mxu0 %v1120
    %1436 = vmatmul.mubr.f32.gmra.mxu0 %v1119
    %v1437 = vpop.f32.mrf.mxu0
    %v1438 = vadd.f32 %v1214, %v1437
    %v1439 = vpop.f32.mrf.mxu0
    %v1440 = vadd.f32 %v1218, %v1439
    %1441 = vmatprep.mubr.f32.mxu0 %v1122
    %1442 = vmatmul.mubr.f32.gmra.mxu0 %v1121
    %v1443 = vpop.f32.mrf.mxu0
    %v1444 = vadd.f32 %v1214, %v1443
    %v1445 = vpop.f32.mrf.mxu0
    %v1446 = vadd.f32 %v1218, %v1445
    %1447 = vmatprep.mubr.f32.mxu0 %v1124
    %1448 = vmatmul.mubr.f32.gmra.mxu0 %v1123
    %v1449 = vpop.f32.mrf.mxu0
    %v1450 = vadd.f32 %v1214, %v1449
    %v1451 = vpop.f32.mrf.mxu0
    %v1452 = vadd.f32 %v1218, %v1451
    %1453 = vmatprep.mubr.f32.mxu0 %v1126
    %1454 = vmatmul.mubr.f32.gmra.mxu0 %v1125
    %v1455 = vpop.f32.mrf.mxu0
    %v1456 = vadd.f32 %v1214, %v1455
    %v1457 = vpop.f32.mrf.mxu0
    %v1458 = vadd.f32 %v1218, %v1457
    %1459 = vmatprep.mubr.f32.mxu0 %v1128
    %1460 = vmatmul.mubr.f32.gmra.mxu0 %v1127
    %v1461 = vpop.f32.mrf.mxu0
    %v1462 = vadd.f32 %v1214, %v1461
    %v1463 = vpop.f32.mrf.mxu0
    %v1464 = vadd.f32 %v1218, %v1463
    %1465 = vmatprep.mubr.f32.mxu0 %v1130
    %1466 = vmatmul.mubr.f32.gmra.mxu0 %v1129
    %v1467 = vpop.f32.mrf.mxu0
    %v1468 = vadd.f32 %v1214, %v1467
    %v1469 = vpop.f32.mrf.mxu0
    %v1470 = vadd.f32 %v1218, %v1469
    %1471 = vmatprep.mubr.f32.mxu0 %v1132
    %1472 = vmatmul.mubr.f32.gmra.mxu0 %v1131
    %v1473 = vpop.f32.mrf.mxu0
    %v1474 = vadd.f32 %v1214, %v1473
    %v1475 = vpop.f32.mrf.mxu0
    %v1476 = vadd.f32 %v1218, %v1475
    %1477 = vmatprep.mubr.f32.mxu0 %v1134
    %1478 = vmatmul.mubr.f32.gmra.mxu0 %v1133
    %v1479 = vpop.f32.mrf.mxu0
    %v1480 = vadd.f32 %v1214, %v1479
    %v1481 = vpop.f32.mrf.mxu0
    %v1482 = vadd.f32 %v1218, %v1481
    %1483 = vmatprep.mubr.f32.mxu0 %v1136
    %1484 = vmatmul.mubr.f32.gmra.mxu0 %v1135
    %v1485 = vpop.f32.mrf.mxu0
    %v1486 = vadd.f32 %v1214, %v1485
    %v1487 = vpop.f32.mrf.mxu0
    %v1488 = vadd.f32 %v1218, %v1487
    %1489 = vmatprep.mubr.f32.mxu0 %v1138
    %1490 = vmatmul.mubr.f32.gmra.mxu0 %v1137
    %v1491 = vpop.f32.mrf.mxu0
    %v1492 = vadd.f32 %v1214, %v1491
    %v1493 = vpop.f32.mrf.mxu0
    %v1494 = vadd.f32 %v1218, %v1493
    %1495 = vmatprep.mubr.f32.mxu0 %v1140
    %1496 = vmatmul.mubr.f32.gmra.mxu0 %v1139
    %v1497 = vpop.f32.mrf.mxu0
    %v1498 = vadd.f32 %v1214, %v1497
    %v1499 = vpop.f32.mrf.mxu0
    %v1500 = vadd.f32 %v1218, %v1499
    %1501 = vmatprep.mubr.f32.mxu0 %v1142
    %1502 = vmatmul.mubr.f32.gmra.mxu0 %v1141
    %v1503 = vpop.f32.mrf.mxu0
    %v1504 = vadd.f32 %v1214, %v1503
    %v1505 = vpop.f32.mrf.mxu0
    %v1506 = vadd.f32 %v1218, %v1505
    %1507 = vmatprep.mubr.f32.mxu0 %v1144
    %1508 = vmatmul.mubr.f32.gmra.mxu0 %v1143
    %v1509 = vpop.f32.mrf.mxu0
    %v1510 = vadd.f32 %v1214, %v1509
    %v1511 = vpop.f32.mrf.mxu0
    %v1512 = vadd.f32 %v1218, %v1511
    %1513 = vdwg.mxu0
    %v1514 = vmul.f32 %v1288, 0.01
    %v1515 = vmul.f32 %v1290, 0.01
    %v1516 = vmul.f32 %v1294, 0.01
    %v1517 = vmul.f32 %v1296, 0.01
    %v1518 = vmul.f32 %v1300, 0.01
    %v1519 = vmul.f32 %v1302, 0.01
    %v1520 = vmul.f32 %v1306, 0.01
    %v1521 = vmul.f32 %v1308, 0.01
    %v1522 = vmul.f32 %v1312, 0.01
    %v1523 = vmul.f32 %v1314, 0.01
    %v1524 = vmul.f32 %v1318, 0.01
    %v1525 = vmul.f32 %v1320, 0.01
    %v1526 = vmul.f32 %v1324, 0.01
    %v1527 = vmul.f32 %v1326, 0.01
    %v1528 = vmul.f32 %v1330, 0.01
    %v1529 = vmul.f32 %v1332, 0.01
    %v1530 = vmul.f32 %v1336, 0.01
    %v1531 = vmul.f32 %v1338, 0.01
    %v1532 = vmul.f32 %v1342, 0.01
    %v1533 = vmul.f32 %v1344, 0.01
    %v1534 = vmul.f32 %v1348, 0.01
    %v1535 = vmul.f32 %v1350, 0.01
    %v1536 = vmul.f32 %v1354, 0.01
    %v1537 = vmul.f32 %v1356, 0.01
    %v1538 = vmul.f32 %v1360, 0.01
    %v1539 = vmul.f32 %v1362, 0.01
    %v1540 = vmul.f32 %v1366, 0.01
    %v1541 = vmul.f32 %v1368, 0.01
    %v1542 = vmul.f32 %v1372, 0.01
    %v1543 = vmul.f32 %v1374, 0.01
    %v1544 = vmul.f32 %v1378, 0.01
    %v1545 = vmul.f32 %v1380, 0.01
    %v1546 = vmul.f32 %v1384, 0.01
    %v1547 = vmul.f32 %v1386, 0.01
    %v1548 = vmul.f32 %v1390, 0.01
    %v1549 = vmul.f32 %v1392, 0.01
    %v1550 = vmul.f32 %v1396, 0.01
    %v1551 = vmul.f32 %v1398, 0.01
    %v1552 = vmul.f32 %v1402, 0.01
    %v1553 = vmul.f32 %v1404, 0.01
    %v1554 = vmul.f32 %v1408, 0.01
    %v1555 = vmul.f32 %v1410, 0.01
    %v1556 = vmul.f32 %v1414, 0.01
    %v1557 = vmul.f32 %v1416, 0.01
    %v1558 = vmul.f32 %v1420, 0.01
    %v1559 = vmul.f32 %v1422, 0.01
    %v1560 = vmul.f32 %v1426, 0.01
    %v1561 = vmul.f32 %v1428, 0.01
    %v1562 = vmul.f32 %v1432, 0.01
    %v1563 = vmul.f32 %v1434, 0.01
    %v1564 = vmul.f32 %v1438, 0.01
    %v1565 = vmul.f32 %v1440, 0.01
    %v1566 = vmul.f32 %v1444, 0.01
    %v1567 = vmul.f32 %v1446, 0.01
    %v1568 = vmul.f32 %v1450, 0.01
    %v1569 = vmul.f32 %v1452, 0.01
    %v1570 = vmul.f32 %v1456, 0.01
    %v1571 = vmul.f32 %v1458, 0.01
    %v1572 = vmul.f32 %v1462, 0.01
    %v1573 = vmul.f32 %v1464, 0.01
    %v1574 = vmul.f32 %v1468, 0.01
    %v1575 = vmul.f32 %v1470, 0.01
    %v1576 = vmul.f32 %v1474, 0.01
    %v1577 = vmul.f32 %v1476, 0.01
    %v1578 = vmul.f32 %v1480, 0.01
    %v1579 = vmul.f32 %v1482, 0.01
    %v1580 = vmul.f32 %v1486, 0.01
    %v1581 = vmul.f32 %v1488, 0.01
    %v1582 = vmul.f32 %v1492, 0.01
    %v1583 = vmul.f32 %v1494, 0.01
    %v1584 = vmul.f32 %v1498, 0.01
    %v1585 = vmul.f32 %v1500, 0.01
    %v1586 = vmul.f32 %v1504, 0.01
    %v1587 = vmul.f32 %v1506, 0.01
    %v1588 = vmul.f32 %v1510, 0.01
    %v1589 = vmul.f32 %v1512, 0.01
    %v1590 = vmax.f32 %v1288, %v1514
    %v1591 = vmax.f32 %v1290, %v1515
    %v1592 = vmax.f32 %v1294, %v1516
    %v1593 = vmax.f32 %v1296, %v1517
    %v1594 = vmax.f32 %v1300, %v1518
    %v1595 = vmax.f32 %v1302, %v1519
    %v1596 = vmax.f32 %v1306, %v1520
    %v1597 = vmax.f32 %v1308, %v1521
    %v1598 = vmax.f32 %v1312, %v1522
    %v1599 = vmax.f32 %v1314, %v1523
    %v1600 = vmax.f32 %v1318, %v1524
    %v1601 = vmax.f32 %v1320, %v1525
    %v1602 = vmax.f32 %v1324, %v1526
    %v1603 = vmax.f32 %v1326, %v1527
    %v1604 = vmax.f32 %v1330, %v1528
    %v1605 = vmax.f32 %v1332, %v1529
    %v1606 = vmax.f32 %v1336, %v1530
    %v1607 = vmax.f32 %v1338, %v1531
    %v1608 = vmax.f32 %v1342, %v1532
    %v1609 = vmax.f32 %v1344, %v1533
    %v1610 = vmax.f32 %v1348, %v1534
    %v1611 = vmax.f32 %v1350, %v1535
    %v1612 = vmax.f32 %v1354, %v1536
    %v1613 = vmax.f32 %v1356, %v1537
    %v1614 = vmax.f32 %v1360, %v1538
    %v1615 = vmax.f32 %v1362, %v1539
    %v1616 = vmax.f32 %v1366, %v1540
    %v1617 = vmax.f32 %v1368, %v1541
    %v1618 = vmax.f32 %v1372, %v1542
    %v1619 = vmax.f32 %v1374, %v1543
    %v1620 = vmax.f32 %v1378, %v1544
    %v1621 = vmax.f32 %v1380, %v1545
    %v1622 = vmax.f32 %v1384, %v1546
    %v1623 = vmax.f32 %v1386, %v1547
    %v1624 = vmax.f32 %v1390, %v1548
    %v1625 = vmax.f32 %v1392, %v1549
    %v1626 = vmax.f32 %v1396, %v1550
    %v1627 = vmax.f32 %v1398, %v1551
    %v1628 = vmax.f32 %v1402, %v1552
    %v1629 = vmax.f32 %v1404, %v1553
    %v1630 = vmax.f32 %v1408, %v1554
    %v1631 = vmax.f32 %v1410, %v1555
    %v1632 = vmax.f32 %v1414, %v1556
    %v1633 = vmax.f32 %v1416, %v1557
    %v1634 = vmax.f32 %v1420, %v1558
    %v1635 = vmax.f32 %v1422, %v1559
    %v1636 = vmax.f32 %v1426, %v1560
    %v1637 = vmax.f32 %v1428, %v1561
    %v1638 = vmax.f32 %v1432, %v1562
    %v1639 = vmax.f32 %v1434, %v1563
    %v1640 = vmax.f32 %v1438, %v1564
    %v1641 = vmax.f32 %v1440, %v1565
    %v1642 = vmax.f32 %v1444, %v1566
    %v1643 = vmax.f32 %v1446, %v1567
    %v1644 = vmax.f32 %v1450, %v1568
    %v1645 = vmax.f32 %v1452, %v1569
    %v1646 = vmax.f32 %v1456, %v1570
    %v1647 = vmax.f32 %v1458, %v1571
    %v1648 = vmax.f32 %v1462, %v1572
    %v1649 = vmax.f32 %v1464, %v1573
    %v1650 = vmax.f32 %v1468, %v1574
    %v1651 = vmax.f32 %v1470, %v1575
    %v1652 = vmax.f32 %v1474, %v1576
    %v1653 = vmax.f32 %v1476, %v1577
    %v1654 = vmax.f32 %v1480, %v1578
    %v1655 = vmax.f32 %v1482, %v1579
    %v1656 = vmax.f32 %v1486, %v1580
    %v1657 = vmax.f32 %v1488, %v1581
    %v1658 = vmax.f32 %v1492, %v1582
    %v1659 = vmax.f32 %v1494, %v1583
    %v1660 = vmax.f32 %v1498, %v1584
    %v1661 = vmax.f32 %v1500, %v1585
    %v1662 = vmax.f32 %v1504, %v1586
    %v1663 = vmax.f32 %v1506, %v1587
    %v1664 = vmax.f32 %v1510, %v1588
    %v1665 = vmax.f32 %v1512, %v1589
    %v1666 = vld [vmem:[#allocation5] sm:$0xff]
    %v1667 = vld [vmem:[#allocation5 + $0x8] sm:$0xff]
    %v1668 = vld [vmem:[#allocation5 + $0x10] sm:$0xff]
    %v1669 = vld [vmem:[#allocation5 + $0x18] sm:$0xff]
    %v1670 = vld [vmem:[#allocation5 + $0x20] sm:$0xff]
    %v1671 = vld [vmem:[#allocation5 + $0x28] sm:$0xff]
    %v1672 = vld [vmem:[#allocation5 + $0x30] sm:$0xff]
    %v1673 = vld [vmem:[#allocation5 + $0x38] sm:$0xff]
    %v1674 = vld [vmem:[#allocation5 + $0x40] sm:$0xff]
    %v1675 = vld [vmem:[#allocation5 + $0x48] sm:$0xff]
    %v1676 = vld [vmem:[#allocation5 + $0x50] sm:$0xff]
    %v1677 = vld [vmem:[#allocation5 + $0x58] sm:$0xff]
    %v1678 = vld [vmem:[#allocation5 + $0x60] sm:$0xff]
    %v1679 = vld [vmem:[#allocation5 + $0x68] sm:$0xff]
    %v1680 = vld [vmem:[#allocation5 + $0x70] sm:$0xff]
    %v1681 = vld [vmem:[#allocation5 + $0x78] sm:$0xff]
    %v1682 = vld [vmem:[#allocation5 + $0x80] sm:$0xff]
    %v1683 = vld [vmem:[#allocation5 + $0x88] sm:$0xff]
    %v1684 = vld [vmem:[#allocation5 + $0x90] sm:$0xff]
    %v1685 = vld [vmem:[#allocation5 + $0x98] sm:$0xff]
    %v1686 = vld [vmem:[#allocation5 + $0xa0] sm:$0xff]
    %v1687 = vld [vmem:[#allocation5 + $0xa8] sm:$0xff]
    %v1688 = vld [vmem:[#allocation5 + $0xb0] sm:$0xff]
    %v1689 = vld [vmem:[#allocation5 + $0xb8] sm:$0xff]
    %v1690 = vld [vmem:[#allocation5 + $0xc0] sm:$0xff]
    %v1691 = vld [vmem:[#allocation5 + $0xc8] sm:$0xff]
    %v1692 = vld [vmem:[#allocation5 + $0xd0] sm:$0xff]
    %v1693 = vld [vmem:[#allocation5 + $0xd8] sm:$0xff]
    %v1694 = vld [vmem:[#allocation5 + $0xe0] sm:$0xff]
    %v1695 = vld [vmem:[#allocation5 + $0xe8] sm:$0xff]
    %v1696 = vld [vmem:[#allocation5 + $0xf0] sm:$0xff]
    %v1697 = vld [vmem:[#allocation5 + $0xf8] sm:$0xff]
    %v1698 = vld [vmem:[#allocation5 + $0x100] sm:$0xff]
    %v1699 = vld [vmem:[#allocation5 + $0x108] sm:$0xff]
    %v1700 = vld [vmem:[#allocation5 + $0x110] sm:$0xff]
    %v1701 = vld [vmem:[#allocation5 + $0x118] sm:$0xff]
    %v1702 = vld [vmem:[#allocation5 + $0x120] sm:$0xff]
    %v1703 = vld [vmem:[#allocation5 + $0x128] sm:$0xff]
    %v1704 = vld [vmem:[#allocation5 + $0x130] sm:$0xff]
    %v1705 = vld [vmem:[#allocation5 + $0x138] sm:$0xff]
    %v1706 = vld [vmem:[#allocation5 + $0x140] sm:$0xff]
    %v1707 = vld [vmem:[#allocation5 + $0x148] sm:$0xff]
    %v1708 = vld [vmem:[#allocation5 + $0x150] sm:$0xff]
    %v1709 = vld [vmem:[#allocation5 + $0x158] sm:$0xff]
    %v1710 = vld [vmem:[#allocation5 + $0x160] sm:$0xff]
    %v1711 = vld [vmem:[#allocation5 + $0x168] sm:$0xff]
    %v1712 = vld [vmem:[#allocation5 + $0x170] sm:$0xff]
    %v1713 = vld [vmem:[#allocation5 + $0x178] sm:$0xff]
    %v1714 = vld [vmem:[#allocation5 + $0x180] sm:$0xff]
    %v1715 = vld [vmem:[#allocation5 + $0x188] sm:$0xff]
    %v1716 = vld [vmem:[#allocation5 + $0x190] sm:$0xff]
    %v1717 = vld [vmem:[#allocation5 + $0x198] sm:$0xff]
    %v1718 = vld [vmem:[#allocation5 + $0x1a0] sm:$0xff]
    %v1719 = vld [vmem:[#allocation5 + $0x1a8] sm:$0xff]
    %v1720 = vld [vmem:[#allocation5 + $0x1b0] sm:$0xff]
    %v1721 = vld [vmem:[#allocation5 + $0x1b8] sm:$0xff]
    %v1722 = vld [vmem:[#allocation5 + $0x1c0] sm:$0xff]
    %v1723 = vld [vmem:[#allocation5 + $0x1c8] sm:$0xff]
    %v1724 = vld [vmem:[#allocation5 + $0x1d0] sm:$0xff]
    %v1725 = vld [vmem:[#allocation5 + $0x1d8] sm:$0xff]
    %v1726 = vld [vmem:[#allocation5 + $0x1e0] sm:$0xff]
    %v1727 = vld [vmem:[#allocation5 + $0x1e8] sm:$0xff]
    %v1728 = vld [vmem:[#allocation5 + $0x1f0] sm:$0xff]
    %v1729 = vld [vmem:[#allocation5 + $0x1f8] sm:$0xff]
    %v1730 = vld [vmem:[%s8] sm:$0x3]
    %v1732 = vlaneseq
    %v1733 = vshrl.u32 %v1732, 7
    %v1734 = vsub.s32 0, %v1733
    %v1735 = vrot.slane %v1730, %v1734
    %v1736 = vlaneseq
    %v1737 = vshrl.u32 %v1736, 7
    %v1738 = vsub.s32 1, %v1737
    %v1739 = vrot.slane %v1730, %v1738
    %1742 = vmatprep.subr.mxu0 %v1697
    %1743 = vmatpush1.msra.mxu0 %v1696
    %1744 = vmatprep.subr.mxu0 %v1695
    %1745 = vmatpush1.msra.mxu0 %v1694
    %1746 = vmatprep.subr.mxu0 %v1693
    %1747 = vmatpush1.msra.mxu0 %v1692
    %1748 = vmatprep.subr.mxu0 %v1691
    %1749 = vmatpush1.msra.mxu0 %v1690
    %1750 = vmatprep.subr.mxu0 %v1689
    %1751 = vmatpush1.msra.mxu0 %v1688
    %1752 = vmatprep.subr.mxu0 %v1687
    %1753 = vmatpush1.msra.mxu0 %v1686
    %1754 = vmatprep.subr.mxu0 %v1685
    %1755 = vmatpush1.msra.mxu0 %v1684
    %1756 = vmatprep.subr.mxu0 %v1683
    %1757 = vmatpush1.msra.mxu0 %v1682
    %1758 = vmatprep.subr.mxu0 %v1681
    %1759 = vmatpush1.msra.mxu0 %v1680
    %1760 = vmatprep.subr.mxu0 %v1679
    %1761 = vmatpush1.msra.mxu0 %v1678
    %1762 = vmatprep.subr.mxu0 %v1677
    %1763 = vmatpush1.msra.mxu0 %v1676
    %1764 = vmatprep.subr.mxu0 %v1675
    %1765 = vmatpush1.msra.mxu0 %v1674
    %1766 = vmatprep.subr.mxu0 %v1673
    %1767 = vmatpush1.msra.mxu0 %v1672
    %1768 = vmatprep.subr.mxu0 %v1671
    %1769 = vmatpush1.msra.mxu0 %v1670
    %1770 = vmatprep.subr.mxu0 %v1669
    %1771 = vmatpush1.msra.mxu0 %v1668
    %1772 = vmatprep.subr.mxu0 %v1667
    %1773 = vmatpush1.msra.mxu0 %v1666
    %1774 = vmatprep.subr.mxu0 %v1729
    %1775 = vmatpush2.msra.mxu0 %v1728
    %1776 = vmatprep.subr.mxu0 %v1727
    %1777 = vmatpush2.msra.mxu0 %v1726
    %1778 = vmatprep.subr.mxu0 %v1725
    %1779 = vmatpush2.msra.mxu0 %v1724
    %1780 = vmatprep.subr.mxu0 %v1723
    %1781 = vmatpush2.msra.mxu0 %v1722
    %1782 = vmatprep.subr.mxu0 %v1721
    %1783 = vmatpush2.msra.mxu0 %v1720
    %1784 = vmatprep.subr.mxu0 %v1719
    %1785 = vmatpush2.msra.mxu0 %v1718
    %1786 = vmatprep.subr.mxu0 %v1717
    %1787 = vmatpush2.msra.mxu0 %v1716
    %1788 = vmatprep.subr.mxu0 %v1715
    %1789 = vmatpush2.msra.mxu0 %v1714
    %1790 = vmatprep.subr.mxu0 %v1713
    %1791 = vmatpush2.msra.mxu0 %v1712
    %1792 = vmatprep.subr.mxu0 %v1711
    %1793 = vmatpush2.msra.mxu0 %v1710
    %1794 = vmatprep.subr.mxu0 %v1709
    %1795 = vmatpush2.msra.mxu0 %v1708
    %1796 = vmatprep.subr.mxu0 %v1707
    %1797 = vmatpush2.msra.mxu0 %v1706
    %1798 = vmatprep.subr.mxu0 %v1705
    %1799 = vmatpush2.msra.mxu0 %v1704
    %1800 = vmatprep.subr.mxu0 %v1703
    %1801 = vmatpush2.msra.mxu0 %v1702
    %1802 = vmatprep.subr.mxu0 %v1701
    %1803 = vmatpush2.msra.mxu0 %v1700
    %1804 = vmatprep.subr.mxu0 %v1699
    %1805 = vmatpush2.msra.mxu0 %v1698
    %1806 = vmatprep.mubr.f32.mxu0 %v1591
    %1807 = vmatmul.mubr.f32.gmra.mxu0 %v1590
    %v1808 = vpop.f32.mrf.mxu0
    %v1809 = vadd.f32 %v1735, %v1808
    %v1810 = vpop.f32.mrf.mxu0
    %v1811 = vadd.f32 %v1739, %v1810
    %1812 = vmatprep.mubr.f32.mxu0 %v1593
    %1813 = vmatmul.mubr.f32.gmra.mxu0 %v1592
    %v1814 = vpop.f32.mrf.mxu0
    %v1815 = vadd.f32 %v1735, %v1814
    %v1816 = vpop.f32.mrf.mxu0
    %v1817 = vadd.f32 %v1739, %v1816
    %1818 = vmatprep.mubr.f32.mxu0 %v1595
    %1819 = vmatmul.mubr.f32.gmra.mxu0 %v1594
    %v1820 = vpop.f32.mrf.mxu0
    %v1821 = vadd.f32 %v1735, %v1820
    %v1822 = vpop.f32.mrf.mxu0
    %v1823 = vadd.f32 %v1739, %v1822
    %1824 = vmatprep.mubr.f32.mxu0 %v1597
    %1825 = vmatmul.mubr.f32.gmra.mxu0 %v1596
    %v1826 = vpop.f32.mrf.mxu0
    %v1827 = vadd.f32 %v1735, %v1826
    %v1828 = vpop.f32.mrf.mxu0
    %v1829 = vadd.f32 %v1739, %v1828
    %1830 = vmatprep.mubr.f32.mxu0 %v1599
    %1831 = vmatmul.mubr.f32.gmra.mxu0 %v1598
    %v1832 = vpop.f32.mrf.mxu0
    %v1833 = vadd.f32 %v1735, %v1832
    %v1834 = vpop.f32.mrf.mxu0
    %v1835 = vadd.f32 %v1739, %v1834
    %1836 = vmatprep.mubr.f32.mxu0 %v1601
    %1837 = vmatmul.mubr.f32.gmra.mxu0 %v1600
    %v1838 = vpop.f32.mrf.mxu0
    %v1839 = vadd.f32 %v1735, %v1838
    %v1840 = vpop.f32.mrf.mxu0
    %v1841 = vadd.f32 %v1739, %v1840
    %1842 = vmatprep.mubr.f32.mxu0 %v1603
    %1843 = vmatmul.mubr.f32.gmra.mxu0 %v1602
    %v1844 = vpop.f32.mrf.mxu0
    %v1845 = vadd.f32 %v1735, %v1844
    %v1846 = vpop.f32.mrf.mxu0
    %v1847 = vadd.f32 %v1739, %v1846
    %1848 = vmatprep.mubr.f32.mxu0 %v1605
    %1849 = vmatmul.mubr.f32.gmra.mxu0 %v1604
    %v1850 = vpop.f32.mrf.mxu0
    %v1851 = vadd.f32 %v1735, %v1850
    %v1852 = vpop.f32.mrf.mxu0
    %v1853 = vadd.f32 %v1739, %v1852
    %1854 = vmatprep.mubr.f32.mxu0 %v1607
    %1855 = vmatmul.mubr.f32.gmra.mxu0 %v1606
    %v1856 = vpop.f32.mrf.mxu0
    %v1857 = vadd.f32 %v1735, %v1856
    %v1858 = vpop.f32.mrf.mxu0
    %v1859 = vadd.f32 %v1739, %v1858
    %1860 = vmatprep.mubr.f32.mxu0 %v1609
    %1861 = vmatmul.mubr.f32.gmra.mxu0 %v1608
    %v1862 = vpop.f32.mrf.mxu0
    %v1863 = vadd.f32 %v1735, %v1862
    %v1864 = vpop.f32.mrf.mxu0
    %v1865 = vadd.f32 %v1739, %v1864
    %1866 = vmatprep.mubr.f32.mxu0 %v1611
    %1867 = vmatmul.mubr.f32.gmra.mxu0 %v1610
    %v1868 = vpop.f32.mrf.mxu0
    %v1869 = vadd.f32 %v1735, %v1868
    %v1870 = vpop.f32.mrf.mxu0
    %v1871 = vadd.f32 %v1739, %v1870
    %1872 = vmatprep.mubr.f32.mxu0 %v1613
    %1873 = vmatmul.mubr.f32.gmra.mxu0 %v1612
    %v1874 = vpop.f32.mrf.mxu0
    %v1875 = vadd.f32 %v1735, %v1874
    %v1876 = vpop.f32.mrf.mxu0
    %v1877 = vadd.f32 %v1739, %v1876
    %1878 = vmatprep.mubr.f32.mxu0 %v1615
    %1879 = vmatmul.mubr.f32.gmra.mxu0 %v1614
    %v1880 = vpop.f32.mrf.mxu0
    %v1881 = vadd.f32 %v1735, %v1880
    %v1882 = vpop.f32.mrf.mxu0
    %v1883 = vadd.f32 %v1739, %v1882
    %1884 = vmatprep.mubr.f32.mxu0 %v1617
    %1885 = vmatmul.mubr.f32.gmra.mxu0 %v1616
    %v1886 = vpop.f32.mrf.mxu0
    %v1887 = vadd.f32 %v1735, %v1886
    %v1888 = vpop.f32.mrf.mxu0
    %v1889 = vadd.f32 %v1739, %v1888
    %1890 = vmatprep.mubr.f32.mxu0 %v1619
    %1891 = vmatmul.mubr.f32.gmra.mxu0 %v1618
    %v1892 = vpop.f32.mrf.mxu0
    %v1893 = vadd.f32 %v1735, %v1892
    %v1894 = vpop.f32.mrf.mxu0
    %v1895 = vadd.f32 %v1739, %v1894
    %1896 = vmatprep.mubr.f32.mxu0 %v1621
    %1897 = vmatmul.mubr.f32.gmra.mxu0 %v1620
    %v1898 = vpop.f32.mrf.mxu0
    %v1899 = vadd.f32 %v1735, %v1898
    %v1900 = vpop.f32.mrf.mxu0
    %v1901 = vadd.f32 %v1739, %v1900
    %1902 = vmatprep.mubr.f32.mxu0 %v1623
    %1903 = vmatmul.mubr.f32.gmra.mxu0 %v1622
    %v1904 = vpop.f32.mrf.mxu0
    %v1905 = vadd.f32 %v1735, %v1904
    %v1906 = vpop.f32.mrf.mxu0
    %v1907 = vadd.f32 %v1739, %v1906
    %1908 = vmatprep.mubr.f32.mxu0 %v1625
    %1909 = vmatmul.mubr.f32.gmra.mxu0 %v1624
    %v1910 = vpop.f32.mrf.mxu0
    %v1911 = vadd.f32 %v1735, %v1910
    %v1912 = vpop.f32.mrf.mxu0
    %v1913 = vadd.f32 %v1739, %v1912
    %1914 = vmatprep.mubr.f32.mxu0 %v1627
    %1915 = vmatmul.mubr.f32.gmra.mxu0 %v1626
    %v1916 = vpop.f32.mrf.mxu0
    %v1917 = vadd.f32 %v1735, %v1916
    %v1918 = vpop.f32.mrf.mxu0
    %v1919 = vadd.f32 %v1739, %v1918
    %1920 = vmatprep.mubr.f32.mxu0 %v1629
    %1921 = vmatmul.mubr.f32.gmra.mxu0 %v1628
    %v1922 = vpop.f32.mrf.mxu0
    %v1923 = vadd.f32 %v1735, %v1922
    %v1924 = vpop.f32.mrf.mxu0
    %v1925 = vadd.f32 %v1739, %v1924
    %1926 = vmatprep.mubr.f32.mxu0 %v1631
    %1927 = vmatmul.mubr.f32.gmra.mxu0 %v1630
    %v1928 = vpop.f32.mrf.mxu0
    %v1929 = vadd.f32 %v1735, %v1928
    %v1930 = vpop.f32.mrf.mxu0
    %v1931 = vadd.f32 %v1739, %v1930
    %1932 = vmatprep.mubr.f32.mxu0 %v1633
    %1933 = vmatmul.mubr.f32.gmra.mxu0 %v1632
    %v1934 = vpop.f32.mrf.mxu0
    %v1935 = vadd.f32 %v1735, %v1934
    %v1936 = vpop.f32.mrf.mxu0
    %v1937 = vadd.f32 %v1739, %v1936
    %1938 = vmatprep.mubr.f32.mxu0 %v1635
    %1939 = vmatmul.mubr.f32.gmra.mxu0 %v1634
    %v1940 = vpop.f32.mrf.mxu0
    %v1941 = vadd.f32 %v1735, %v1940
    %v1942 = vpop.f32.mrf.mxu0
    %v1943 = vadd.f32 %v1739, %v1942
    %1944 = vmatprep.mubr.f32.mxu0 %v1637
    %1945 = vmatmul.mubr.f32.gmra.mxu0 %v1636
    %v1946 = vpop.f32.mrf.mxu0
    %v1947 = vadd.f32 %v1735, %v1946
    %v1948 = vpop.f32.mrf.mxu0
    %v1949 = vadd.f32 %v1739, %v1948
    %1950 = vmatprep.mubr.f32.mxu0 %v1639
    %1951 = vmatmul.mubr.f32.gmra.mxu0 %v1638
    %v1952 = vpop.f32.mrf.mxu0
    %v1953 = vadd.f32 %v1735, %v1952
    %v1954 = vpop.f32.mrf.mxu0
    %v1955 = vadd.f32 %v1739, %v1954
    %1956 = vmatprep.mubr.f32.mxu0 %v1641
    %1957 = vmatmul.mubr.f32.gmra.mxu0 %v1640
    %v1958 = vpop.f32.mrf.mxu0
    %v1959 = vadd.f32 %v1735, %v1958
    %v1960 = vpop.f32.mrf.mxu0
    %v1961 = vadd.f32 %v1739, %v1960
    %1962 = vmatprep.mubr.f32.mxu0 %v1643
    %1963 = vmatmul.mubr.f32.gmra.mxu0 %v1642
    %v1964 = vpop.f32.mrf.mxu0
    %v1965 = vadd.f32 %v1735, %v1964
    %v1966 = vpop.f32.mrf.mxu0
    %v1967 = vadd.f32 %v1739, %v1966
    %1968 = vmatprep.mubr.f32.mxu0 %v1645
    %1969 = vmatmul.mubr.f32.gmra.mxu0 %v1644
    %v1970 = vpop.f32.mrf.mxu0
    %v1971 = vadd.f32 %v1735, %v1970
    %v1972 = vpop.f32.mrf.mxu0
    %v1973 = vadd.f32 %v1739, %v1972
    %1974 = vmatprep.mubr.f32.mxu0 %v1647
    %1975 = vmatmul.mubr.f32.gmra.mxu0 %v1646
    %v1976 = vpop.f32.mrf.mxu0
    %v1977 = vadd.f32 %v1735, %v1976
    %v1978 = vpop.f32.mrf.mxu0
    %v1979 = vadd.f32 %v1739, %v1978
    %1980 = vmatprep.mubr.f32.mxu0 %v1649
    %1981 = vmatmul.mubr.f32.gmra.mxu0 %v1648
    %v1982 = vpop.f32.mrf.mxu0
    %v1983 = vadd.f32 %v1735, %v1982
    %v1984 = vpop.f32.mrf.mxu0
    %v1985 = vadd.f32 %v1739, %v1984
    %1986 = vmatprep.mubr.f32.mxu0 %v1651
    %1987 = vmatmul.mubr.f32.gmra.mxu0 %v1650
    %v1988 = vpop.f32.mrf.mxu0
    %v1989 = vadd.f32 %v1735, %v1988
    %v1990 = vpop.f32.mrf.mxu0
    %v1991 = vadd.f32 %v1739, %v1990
    %1992 = vmatprep.mubr.f32.mxu0 %v1653
    %1993 = vmatmul.mubr.f32.gmra.mxu0 %v1652
    %v1994 = vpop.f32.mrf.mxu0
    %v1995 = vadd.f32 %v1735, %v1994
    %v1996 = vpop.f32.mrf.mxu0
    %v1997 = vadd.f32 %v1739, %v1996
    %1998 = vmatprep.mubr.f32.mxu0 %v1655
    %1999 = vmatmul.mubr.f32.gmra.mxu0 %v1654
    %v2000 = vpop.f32.mrf.mxu0
    %v2001 = vadd.f32 %v1735, %v2000
    %v2002 = vpop.f32.mrf.mxu0
    %v2003 = vadd.f32 %v1739, %v2002
    %2004 = vmatprep.mubr.f32.mxu0 %v1657
    %2005 = vmatmul.mubr.f32.gmra.mxu0 %v1656
    %v2006 = vpop.f32.mrf.mxu0
    %v2007 = vadd.f32 %v1735, %v2006
    %v2008 = vpop.f32.mrf.mxu0
    %v2009 = vadd.f32 %v1739, %v2008
    %2010 = vmatprep.mubr.f32.mxu0 %v1659
    %2011 = vmatmul.mubr.f32.gmra.mxu0 %v1658
    %v2012 = vpop.f32.mrf.mxu0
    %v2013 = vadd.f32 %v1735, %v2012
    %v2014 = vpop.f32.mrf.mxu0
    %v2015 = vadd.f32 %v1739, %v2014
    %2016 = vmatprep.mubr.f32.mxu0 %v1661
    %2017 = vmatmul.mubr.f32.gmra.mxu0 %v1660
    %v2018 = vpop.f32.mrf.mxu0
    %v2019 = vadd.f32 %v1735, %v2018
    %v2020 = vpop.f32.mrf.mxu0
    %v2021 = vadd.f32 %v1739, %v2020
    %2022 = vmatprep.mubr.f32.mxu0 %v1663
    %2023 = vmatmul.mubr.f32.gmra.mxu0 %v1662
    %v2024 = vpop.f32.mrf.mxu0
    %v2025 = vadd.f32 %v1735, %v2024
    %v2026 = vpop.f32.mrf.mxu0
    %v2027 = vadd.f32 %v1739, %v2026
    %2028 = vmatprep.mubr.f32.mxu0 %v1665
    %2029 = vmatmul.mubr.f32.gmra.mxu0 %v1664
    %v2030 = vpop.f32.mrf.mxu0
    %v2031 = vadd.f32 %v1735, %v2030
    %v2032 = vpop.f32.mrf.mxu0
    %v2033 = vadd.f32 %v1739, %v2032
    %2034 = vdwg.mxu0
    %v2035 = vmul.f32 %v1809, 0.01
    %v2036 = vmul.f32 %v1811, 0.01
    %v2037 = vmul.f32 %v1815, 0.01
    %v2038 = vmul.f32 %v1817, 0.01
    %v2039 = vmul.f32 %v1821, 0.01
    %v2040 = vmul.f32 %v1823, 0.01
    %v2041 = vmul.f32 %v1827, 0.01
    %v2042 = vmul.f32 %v1829, 0.01
    %v2043 = vmul.f32 %v1833, 0.01
    %v2044 = vmul.f32 %v1835, 0.01
    %v2045 = vmul.f32 %v1839, 0.01
    %v2046 = vmul.f32 %v1841, 0.01
    %v2047 = vmul.f32 %v1845, 0.01
    %v2048 = vmul.f32 %v1847, 0.01
    %v2049 = vmul.f32 %v1851, 0.01
    %v2050 = vmul.f32 %v1853, 0.01
    %v2051 = vmul.f32 %v1857, 0.01
    %v2052 = vmul.f32 %v1859, 0.01
    %v2053 = vmul.f32 %v1863, 0.01
    %v2054 = vmul.f32 %v1865, 0.01
    %v2055 = vmul.f32 %v1869, 0.01
    %v2056 = vmul.f32 %v1871, 0.01
    %v2057 = vmul.f32 %v1875, 0.01
    %v2058 = vmul.f32 %v1877, 0.01
    %v2059 = vmul.f32 %v1881, 0.01
    %v2060 = vmul.f32 %v1883, 0.01
    %v2061 = vmul.f32 %v1887, 0.01
    %v2062 = vmul.f32 %v1889, 0.01
    %v2063 = vmul.f32 %v1893, 0.01
    %v2064 = vmul.f32 %v1895, 0.01
    %v2065 = vmul.f32 %v1899, 0.01
    %v2066 = vmul.f32 %v1901, 0.01
    %v2067 = vmul.f32 %v1905, 0.01
    %v2068 = vmul.f32 %v1907, 0.01
    %v2069 = vmul.f32 %v1911, 0.01
    %v2070 = vmul.f32 %v1913, 0.01
    %v2071 = vmul.f32 %v1917, 0.01
    %v2072 = vmul.f32 %v1919, 0.01
    %v2073 = vmul.f32 %v1923, 0.01
    %v2074 = vmul.f32 %v1925, 0.01
    %v2075 = vmul.f32 %v1929, 0.01
    %v2076 = vmul.f32 %v1931, 0.01
    %v2077 = vmul.f32 %v1935, 0.01
    %v2078 = vmul.f32 %v1937, 0.01
    %v2079 = vmul.f32 %v1941, 0.01
    %v2080 = vmul.f32 %v1943, 0.01
    %v2081 = vmul.f32 %v1947, 0.01
    %v2082 = vmul.f32 %v1949, 0.01
    %v2083 = vmul.f32 %v1953, 0.01
    %v2084 = vmul.f32 %v1955, 0.01
    %v2085 = vmul.f32 %v1959, 0.01
    %v2086 = vmul.f32 %v1961, 0.01
    %v2087 = vmul.f32 %v1965, 0.01
    %v2088 = vmul.f32 %v1967, 0.01
    %v2089 = vmul.f32 %v1971, 0.01
    %v2090 = vmul.f32 %v1973, 0.01
    %v2091 = vmul.f32 %v1977, 0.01
    %v2092 = vmul.f32 %v1979, 0.01
    %v2093 = vmul.f32 %v1983, 0.01
    %v2094 = vmul.f32 %v1985, 0.01
    %v2095 = vmul.f32 %v1989, 0.01
    %v2096 = vmul.f32 %v1991, 0.01
    %v2097 = vmul.f32 %v1995, 0.01
    %v2098 = vmul.f32 %v1997, 0.01
    %v2099 = vmul.f32 %v2001, 0.01
    %v2100 = vmul.f32 %v2003, 0.01
    %v2101 = vmul.f32 %v2007, 0.01
    %v2102 = vmul.f32 %v2009, 0.01
    %v2103 = vmul.f32 %v2013, 0.01
    %v2104 = vmul.f32 %v2015, 0.01
    %v2105 = vmul.f32 %v2019, 0.01
    %v2106 = vmul.f32 %v2021, 0.01
    %v2107 = vmul.f32 %v2025, 0.01
    %v2108 = vmul.f32 %v2027, 0.01
    %v2109 = vmul.f32 %v2031, 0.01
    %v2110 = vmul.f32 %v2033, 0.01
    %v2111 = vmax.f32 %v1809, %v2035
    %v2112 = vmax.f32 %v1811, %v2036
    %v2113 = vmax.f32 %v1815, %v2037
    %v2114 = vmax.f32 %v1817, %v2038
    %v2115 = vmax.f32 %v1821, %v2039
    %v2116 = vmax.f32 %v1823, %v2040
    %v2117 = vmax.f32 %v1827, %v2041
    %v2118 = vmax.f32 %v1829, %v2042
    %v2119 = vmax.f32 %v1833, %v2043
    %v2120 = vmax.f32 %v1835, %v2044
    %v2121 = vmax.f32 %v1839, %v2045
    %v2122 = vmax.f32 %v1841, %v2046
    %v2123 = vmax.f32 %v1845, %v2047
    %v2124 = vmax.f32 %v1847, %v2048
    %v2125 = vmax.f32 %v1851, %v2049
    %v2126 = vmax.f32 %v1853, %v2050
    %v2127 = vmax.f32 %v1857, %v2051
    %v2128 = vmax.f32 %v1859, %v2052
    %v2129 = vmax.f32 %v1863, %v2053
    %v2130 = vmax.f32 %v1865, %v2054
    %v2131 = vmax.f32 %v1869, %v2055
    %v2132 = vmax.f32 %v1871, %v2056
    %v2133 = vmax.f32 %v1875, %v2057
    %v2134 = vmax.f32 %v1877, %v2058
    %v2135 = vmax.f32 %v1881, %v2059
    %v2136 = vmax.f32 %v1883, %v2060
    %v2137 = vmax.f32 %v1887, %v2061
    %v2138 = vmax.f32 %v1889, %v2062
    %v2139 = vmax.f32 %v1893, %v2063
    %v2140 = vmax.f32 %v1895, %v2064
    %v2141 = vmax.f32 %v1899, %v2065
    %v2142 = vmax.f32 %v1901, %v2066
    %v2143 = vmax.f32 %v1905, %v2067
    %v2144 = vmax.f32 %v1907, %v2068
    %v2145 = vmax.f32 %v1911, %v2069
    %v2146 = vmax.f32 %v1913, %v2070
    %v2147 = vmax.f32 %v1917, %v2071
    %v2148 = vmax.f32 %v1919, %v2072
    %v2149 = vmax.f32 %v1923, %v2073
    %v2150 = vmax.f32 %v1925, %v2074
    %v2151 = vmax.f32 %v1929, %v2075
    %v2152 = vmax.f32 %v1931, %v2076
    %v2153 = vmax.f32 %v1935, %v2077
    %v2154 = vmax.f32 %v1937, %v2078
    %v2155 = vmax.f32 %v1941, %v2079
    %v2156 = vmax.f32 %v1943, %v2080
    %v2157 = vmax.f32 %v1947, %v2081
    %v2158 = vmax.f32 %v1949, %v2082
    %v2159 = vmax.f32 %v1953, %v2083
    %v2160 = vmax.f32 %v1955, %v2084
    %v2161 = vmax.f32 %v1959, %v2085
    %v2162 = vmax.f32 %v1961, %v2086
    %v2163 = vmax.f32 %v1965, %v2087
    %v2164 = vmax.f32 %v1967, %v2088
    %v2165 = vmax.f32 %v1971, %v2089
    %v2166 = vmax.f32 %v1973, %v2090
    %v2167 = vmax.f32 %v1977, %v2091
    %v2168 = vmax.f32 %v1979, %v2092
    %v2169 = vmax.f32 %v1983, %v2093
    %v2170 = vmax.f32 %v1985, %v2094
    %v2171 = vmax.f32 %v1989, %v2095
    %v2172 = vmax.f32 %v1991, %v2096
    %v2173 = vmax.f32 %v1995, %v2097
    %v2174 = vmax.f32 %v1997, %v2098
    %v2175 = vmax.f32 %v2001, %v2099
    %v2176 = vmax.f32 %v2003, %v2100
    %v2177 = vmax.f32 %v2007, %v2101
    %v2178 = vmax.f32 %v2009, %v2102
    %v2179 = vmax.f32 %v2013, %v2103
    %v2180 = vmax.f32 %v2015, %v2104
    %v2181 = vmax.f32 %v2019, %v2105
    %v2182 = vmax.f32 %v2021, %v2106
    %v2183 = vmax.f32 %v2025, %v2107
    %v2184 = vmax.f32 %v2027, %v2108
    %v2185 = vmax.f32 %v2031, %v2109
    %v2186 = vmax.f32 %v2033, %v2110
    %v2187 = vld [vmem:[%s9] sm:$0x3]
    %v2189 = vlaneseq
    %v2190 = vshrl.u32 %v2189, 7
    %v2191 = vsub.s32 0, %v2190
    %v2192 = vrot.slane %v2187, %v2191
    %v2193 = vlaneseq
    %v2194 = vshrl.u32 %v2193, 7
    %v2195 = vsub.s32 1, %v2194
    %v2196 = vrot.slane %v2187, %v2195
    %v2199 = vmul.f32 %v2111, %v2192
    %v2200 = vmul.f32 %v2112, %v2196
    %v2201 = vmul.f32 %v2113, %v2192
    %v2202 = vmul.f32 %v2114, %v2196
    %v2203 = vmul.f32 %v2115, %v2192
    %v2204 = vmul.f32 %v2116, %v2196
    %v2205 = vmul.f32 %v2117, %v2192
    %v2206 = vmul.f32 %v2118, %v2196
    %v2207 = vmul.f32 %v2119, %v2192
    %v2208 = vmul.f32 %v2120, %v2196
    %v2209 = vmul.f32 %v2121, %v2192
    %v2210 = vmul.f32 %v2122, %v2196
    %v2211 = vmul.f32 %v2123, %v2192
    %v2212 = vmul.f32 %v2124, %v2196
    %v2213 = vmul.f32 %v2125, %v2192
    %v2214 = vmul.f32 %v2126, %v2196
    %v2215 = vmul.f32 %v2127, %v2192
    %v2216 = vmul.f32 %v2128, %v2196
    %v2217 = vmul.f32 %v2129, %v2192
    %v2218 = vmul.f32 %v2130, %v2196
    %v2219 = vmul.f32 %v2131, %v2192
    %v2220 = vmul.f32 %v2132, %v2196
    %v2221 = vmul.f32 %v2133, %v2192
    %v2222 = vmul.f32 %v2134, %v2196
    %v2223 = vmul.f32 %v2135, %v2192
    %v2224 = vmul.f32 %v2136, %v2196
    %v2225 = vmul.f32 %v2137, %v2192
    %v2226 = vmul.f32 %v2138, %v2196
    %v2227 = vmul.f32 %v2139, %v2192
    %v2228 = vmul.f32 %v2140, %v2196
    %v2229 = vmul.f32 %v2141, %v2192
    %v2230 = vmul.f32 %v2142, %v2196
    %v2231 = vmul.f32 %v2143, %v2192
    %v2232 = vmul.f32 %v2144, %v2196
    %v2233 = vmul.f32 %v2145, %v2192
    %v2234 = vmul.f32 %v2146, %v2196
    %v2235 = vmul.f32 %v2147, %v2192
    %v2236 = vmul.f32 %v2148, %v2196
    %v2237 = vmul.f32 %v2149, %v2192
    %v2238 = vmul.f32 %v2150, %v2196
    %v2239 = vmul.f32 %v2151, %v2192
    %v2240 = vmul.f32 %v2152, %v2196
    %v2241 = vmul.f32 %v2153, %v2192
    %v2242 = vmul.f32 %v2154, %v2196
    %v2243 = vmul.f32 %v2155, %v2192
    %v2244 = vmul.f32 %v2156, %v2196
    %v2245 = vmul.f32 %v2157, %v2192
    %v2246 = vmul.f32 %v2158, %v2196
    %v2247 = vmul.f32 %v2159, %v2192
    %v2248 = vmul.f32 %v2160, %v2196
    %v2249 = vmul.f32 %v2161, %v2192
    %v2250 = vmul.f32 %v2162, %v2196
    %v2251 = vmul.f32 %v2163, %v2192
    %v2252 = vmul.f32 %v2164, %v2196
    %v2253 = vmul.f32 %v2165, %v2192
    %v2254 = vmul.f32 %v2166, %v2196
    %v2255 = vmul.f32 %v2167, %v2192
    %v2256 = vmul.f32 %v2168, %v2196
    %v2257 = vmul.f32 %v2169, %v2192
    %v2258 = vmul.f32 %v2170, %v2196
    %v2259 = vmul.f32 %v2171, %v2192
    %v2260 = vmul.f32 %v2172, %v2196
    %v2261 = vmul.f32 %v2173, %v2192
    %v2262 = vmul.f32 %v2174, %v2196
    %v2263 = vmul.f32 %v2175, %v2192
    %v2264 = vmul.f32 %v2176, %v2196
    %v2265 = vmul.f32 %v2177, %v2192
    %v2266 = vmul.f32 %v2178, %v2196
    %v2267 = vmul.f32 %v2179, %v2192
    %v2268 = vmul.f32 %v2180, %v2196
    %v2269 = vmul.f32 %v2181, %v2192
    %v2270 = vmul.f32 %v2182, %v2196
    %v2271 = vmul.f32 %v2183, %v2192
    %v2272 = vmul.f32 %v2184, %v2196
    %v2273 = vmul.f32 %v2185, %v2192
    %v2274 = vmul.f32 %v2186, %v2196
    %v2275 = vadd.f32 %v2199, %v2200
    %2276 = vadd.xlane.f32.xlu0 %v2275
    %v2277 = vpop.xlane.xlu0 %2276
    %v2278 = vadd.f32 %v2201, %v2202
    %2279 = vadd.xlane.f32.xlu0 %v2278
    %v2280 = vpop.xlane.xlu0 %2279
    %v2281 = vadd.f32 %v2203, %v2204
    %2282 = vadd.xlane.f32.xlu0 %v2281
    %v2283 = vpop.xlane.xlu0 %2282
    %v2284 = vadd.f32 %v2205, %v2206
    %2285 = vadd.xlane.f32.xlu0 %v2284
    %v2286 = vpop.xlane.xlu0 %2285
    %v2287 = vadd.f32 %v2207, %v2208
    %2288 = vadd.xlane.f32.xlu0 %v2287
    %v2289 = vpop.xlane.xlu0 %2288
    %v2290 = vadd.f32 %v2209, %v2210
    %2291 = vadd.xlane.f32.xlu0 %v2290
    %v2292 = vpop.xlane.xlu0 %2291
    %v2293 = vadd.f32 %v2211, %v2212
    %2294 = vadd.xlane.f32.xlu0 %v2293
    %v2295 = vpop.xlane.xlu0 %2294
    %v2296 = vadd.f32 %v2213, %v2214
    %2297 = vadd.xlane.f32.xlu0 %v2296
    %v2298 = vpop.xlane.xlu0 %2297
    %v2299 = vadd.f32 %v2215, %v2216
    %2300 = vadd.xlane.f32.xlu0 %v2299
    %v2301 = vpop.xlane.xlu0 %2300
    %v2302 = vadd.f32 %v2217, %v2218
    %2303 = vadd.xlane.f32.xlu0 %v2302
    %v2304 = vpop.xlane.xlu0 %2303
    %v2305 = vadd.f32 %v2219, %v2220
    %2306 = vadd.xlane.f32.xlu0 %v2305
    %v2307 = vpop.xlane.xlu0 %2306
    %v2308 = vadd.f32 %v2221, %v2222
    %2309 = vadd.xlane.f32.xlu0 %v2308
    %v2310 = vpop.xlane.xlu0 %2309
    %v2311 = vadd.f32 %v2223, %v2224
    %2312 = vadd.xlane.f32.xlu0 %v2311
    %v2313 = vpop.xlane.xlu0 %2312
    %v2314 = vadd.f32 %v2225, %v2226
    %2315 = vadd.xlane.f32.xlu0 %v2314
    %v2316 = vpop.xlane.xlu0 %2315
    %v2317 = vadd.f32 %v2227, %v2228
    %2318 = vadd.xlane.f32.xlu0 %v2317
    %v2319 = vpop.xlane.xlu0 %2318
    %v2320 = vadd.f32 %v2229, %v2230
    %2321 = vadd.xlane.f32.xlu0 %v2320
    %v2322 = vpop.xlane.xlu0 %2321
    %v2323 = vadd.f32 %v2231, %v2232
    %2324 = vadd.xlane.f32.xlu0 %v2323
    %v2325 = vpop.xlane.xlu0 %2324
    %v2326 = vadd.f32 %v2233, %v2234
    %2327 = vadd.xlane.f32.xlu0 %v2326
    %v2328 = vpop.xlane.xlu0 %2327
    %v2329 = vadd.f32 %v2235, %v2236
    %2330 = vadd.xlane.f32.xlu0 %v2329
    %v2331 = vpop.xlane.xlu0 %2330
    %v2332 = vadd.f32 %v2237, %v2238
    %2333 = vadd.xlane.f32.xlu0 %v2332
    %v2334 = vpop.xlane.xlu0 %2333
    %v2335 = vadd.f32 %v2239, %v2240
    %2336 = vadd.xlane.f32.xlu0 %v2335
    %v2337 = vpop.xlane.xlu0 %2336
    %v2338 = vadd.f32 %v2241, %v2242
    %2339 = vadd.xlane.f32.xlu0 %v2338
    %v2340 = vpop.xlane.xlu0 %2339
    %v2341 = vadd.f32 %v2243, %v2244
    %2342 = vadd.xlane.f32.xlu0 %v2341
    %v2343 = vpop.xlane.xlu0 %2342
    %v2344 = vadd.f32 %v2245, %v2246
    %2345 = vadd.xlane.f32.xlu0 %v2344
    %v2346 = vpop.xlane.xlu0 %2345
    %v2347 = vadd.f32 %v2247, %v2248
    %2348 = vadd.xlane.f32.xlu0 %v2347
    %v2349 = vpop.xlane.xlu0 %2348
    %v2350 = vadd.f32 %v2249, %v2250
    %2351 = vadd.xlane.f32.xlu0 %v2350
    %v2352 = vpop.xlane.xlu0 %2351
    %v2353 = vadd.f32 %v2251, %v2252
    %2354 = vadd.xlane.f32.xlu0 %v2353
    %v2355 = vpop.xlane.xlu0 %2354
    %v2356 = vadd.f32 %v2253, %v2254
    %2357 = vadd.xlane.f32.xlu0 %v2356
    %v2358 = vpop.xlane.xlu0 %2357
    %v2359 = vadd.f32 %v2255, %v2256
    %2360 = vadd.xlane.f32.xlu0 %v2359
    %v2361 = vpop.xlane.xlu0 %2360
    %v2362 = vadd.f32 %v2257, %v2258
    %2363 = vadd.xlane.f32.xlu0 %v2362
    %v2364 = vpop.xlane.xlu0 %2363
    %v2365 = vadd.f32 %v2259, %v2260
    %2366 = vadd.xlane.f32.xlu0 %v2365
    %v2367 = vpop.xlane.xlu0 %2366
    %v2368 = vadd.f32 %v2261, %v2262
    %2369 = vadd.xlane.f32.xlu0 %v2368
    %v2370 = vpop.xlane.xlu0 %2369
    %v2371 = vadd.f32 %v2263, %v2264
    %2372 = vadd.xlane.f32.xlu0 %v2371
    %v2373 = vpop.xlane.xlu0 %2372
    %v2374 = vadd.f32 %v2265, %v2266
    %2375 = vadd.xlane.f32.xlu0 %v2374
    %v2376 = vpop.xlane.xlu0 %2375
    %v2377 = vadd.f32 %v2267, %v2268
    %2378 = vadd.xlane.f32.xlu0 %v2377
    %v2379 = vpop.xlane.xlu0 %2378
    %v2380 = vadd.f32 %v2269, %v2270
    %2381 = vadd.xlane.f32.xlu0 %v2380
    %v2382 = vpop.xlane.xlu0 %2381
    %v2383 = vadd.f32 %v2271, %v2272
    %2384 = vadd.xlane.f32.xlu0 %v2383
    %v2385 = vpop.xlane.xlu0 %2384
    %v2386 = vadd.f32 %v2273, %v2274
    %2387 = vadd.xlane.f32.xlu0 %v2386
    %v2388 = vpop.xlane.xlu0 %2387
    %v2389 = vld [vmem:[#allocation2] sm:$0x1]
    %v2391 = vlaneseq
    %v2392 = vshrl.u32 %v2391, 7
    %v2393 = vsub.s32 0, %v2392
    %v2394 = vrot.slane %v2389, %v2393
    %v2396 = vadd.f32 %v2277, %v2394
    %v2397 = vadd.f32 %v2280, %v2394
    %v2398 = vadd.f32 %v2283, %v2394
    %v2399 = vadd.f32 %v2286, %v2394
    %v2400 = vadd.f32 %v2289, %v2394
    %v2401 = vadd.f32 %v2292, %v2394
    %v2402 = vadd.f32 %v2295, %v2394
    %v2403 = vadd.f32 %v2298, %v2394
    %v2404 = vadd.f32 %v2301, %v2394
    %v2405 = vadd.f32 %v2304, %v2394
    %v2406 = vadd.f32 %v2307, %v2394
    %v2407 = vadd.f32 %v2310, %v2394
    %v2408 = vadd.f32 %v2313, %v2394
    %v2409 = vadd.f32 %v2316, %v2394
    %v2410 = vadd.f32 %v2319, %v2394
    %v2411 = vadd.f32 %v2322, %v2394
    %v2412 = vadd.f32 %v2325, %v2394
    %v2413 = vadd.f32 %v2328, %v2394
    %v2414 = vadd.f32 %v2331, %v2394
    %v2415 = vadd.f32 %v2334, %v2394
    %v2416 = vadd.f32 %v2337, %v2394
    %v2417 = vadd.f32 %v2340, %v2394
    %v2418 = vadd.f32 %v2343, %v2394
    %v2419 = vadd.f32 %v2346, %v2394
    %v2420 = vadd.f32 %v2349, %v2394
    %v2421 = vadd.f32 %v2352, %v2394
    %v2422 = vadd.f32 %v2355, %v2394
    %v2423 = vadd.f32 %v2358, %v2394
    %v2424 = vadd.f32 %v2361, %v2394
    %v2425 = vadd.f32 %v2364, %v2394
    %v2426 = vadd.f32 %v2367, %v2394
    %v2427 = vadd.f32 %v2370, %v2394
    %v2428 = vadd.f32 %v2373, %v2394
    %v2429 = vadd.f32 %v2376, %v2394
    %v2430 = vadd.f32 %v2379, %v2394
    %v2431 = vadd.f32 %v2382, %v2394
    %v2432 = vadd.f32 %v2385, %v2394
    %v2433 = vadd.f32 %v2388, %v2394
    %vm2434 = vcmask 7168
    %2435 = vst.msk [vmem:[%s11] sm:$0xff] %vm2434, %v2396
    %2436 = vst.msk [vmem:[%s11 + $0x8] sm:$0xff] %vm2434, %v2397
    %2437 = vst.msk [vmem:[%s11 + $0x10] sm:$0xff] %vm2434, %v2398
    %2438 = vst.msk [vmem:[%s11 + $0x18] sm:$0xff] %vm2434, %v2399
    %2439 = vst.msk [vmem:[%s11 + $0x20] sm:$0xff] %vm2434, %v2400
    %2440 = vst.msk [vmem:[%s11 + $0x28] sm:$0xff] %vm2434, %v2401
    %2441 = vst.msk [vmem:[%s11 + $0x30] sm:$0xff] %vm2434, %v2402
    %2442 = vst.msk [vmem:[%s11 + $0x38] sm:$0xff] %vm2434, %v2403
    %2443 = vst.msk [vmem:[%s11 + $0x40] sm:$0xff] %vm2434, %v2404
    %2444 = vst.msk [vmem:[%s11 + $0x48] sm:$0xff] %vm2434, %v2405
    %2445 = vst.msk [vmem:[%s11 + $0x50] sm:$0xff] %vm2434, %v2406
    %2446 = vst.msk [vmem:[%s11 + $0x58] sm:$0xff] %vm2434, %v2407
    %2447 = vst.msk [vmem:[%s11 + $0x60] sm:$0xff] %vm2434, %v2408
    %2448 = vst.msk [vmem:[%s11 + $0x68] sm:$0xff] %vm2434, %v2409
    %2449 = vst.msk [vmem:[%s11 + $0x70] sm:$0xff] %vm2434, %v2410
    %2450 = vst.msk [vmem:[%s11 + $0x78] sm:$0xff] %vm2434, %v2411
    %2451 = vst.msk [vmem:[%s11 + $0x80] sm:$0xff] %vm2434, %v2412
    %2452 = vst.msk [vmem:[%s11 + $0x88] sm:$0xff] %vm2434, %v2413
    %2453 = vst.msk [vmem:[%s11 + $0x90] sm:$0xff] %vm2434, %v2414
    %2454 = vst.msk [vmem:[%s11 + $0x98] sm:$0xff] %vm2434, %v2415
    %2455 = vst.msk [vmem:[%s11 + $0xa0] sm:$0xff] %vm2434, %v2416
    %2456 = vst.msk [vmem:[%s11 + $0xa8] sm:$0xff] %vm2434, %v2417
    %2457 = vst.msk [vmem:[%s11 + $0xb0] sm:$0xff] %vm2434, %v2418
    %2458 = vst.msk [vmem:[%s11 + $0xb8] sm:$0xff] %vm2434, %v2419
    %2459 = vst.msk [vmem:[%s11 + $0xc0] sm:$0xff] %vm2434, %v2420
    %2460 = vst.msk [vmem:[%s11 + $0xc8] sm:$0xff] %vm2434, %v2421
    %2461 = vst.msk [vmem:[%s11 + $0xd0] sm:$0xff] %vm2434, %v2422
    %2462 = vst.msk [vmem:[%s11 + $0xd8] sm:$0xff] %vm2434, %v2423
    %2463 = vst.msk [vmem:[%s11 + $0xe0] sm:$0xff] %vm2434, %v2424
    %2464 = vst.msk [vmem:[%s11 + $0xe8] sm:$0xff] %vm2434, %v2425
    %2465 = vst.msk [vmem:[%s11 + $0xf0] sm:$0xff] %vm2434, %v2426
    %2466 = vst.msk [vmem:[%s11 + $0xf8] sm:$0xff] %vm2434, %v2427
    %2467 = vst.msk [vmem:[%s11 + $0x100] sm:$0xff] %vm2434, %v2428
    %2468 = vst.msk [vmem:[%s11 + $0x108] sm:$0xff] %vm2434, %v2429
    %2469 = vst.msk [vmem:[%s11 + $0x110] sm:$0xff] %vm2434, %v2430
    %2470 = vst.msk [vmem:[%s11 + $0x118] sm:$0xff] %vm2434, %v2431
    %2471 = vst.msk [vmem:[%s11 + $0x120] sm:$0xff] %vm2434, %v2432
    %2472 = vst.msk [vmem:[%s11 + $0x128] sm:$0xff] %vm2434, %v2433
    // Predicated region
    $region54: #{mlp2_forward.1} parent=1 // pred_check
      _
    $region55: #{mlp2_forward.1} parent=1 // pred_check_branch
      %2474 = sbr.rel (0) target = $region57
    $region56: #{mlp2_forward.1} parent=1 // pred_region
      _
    $region57: #{mlp2_forward.1} parent=1 // pred_fallthru
      _
    // Predicated region
    $region58: #{mlp2_forward.1} parent=1 // pred_check
      _
    $region59: #{mlp2_forward.1} parent=1 // pred_check_branch
      %2476 = sbr.rel (0) target = $region61
    $region60: #{mlp2_forward.1} parent=1 // pred_region
      _
    $region61: #{mlp2_forward.1} parent=1 // pred_fallthru
      _
    %2477 = vsyncpa [#allocation4], 1
    %2478 = vsyncpa [#allocation6], 1

</llo_original>
